<compile_context>
chip_gen: v6e
topology: v6e:2x2x1
jax: 0.10.0
libtpu: 0.0.40
codegen_flags: <defaults>
</compile_context>

<pallas_src>
import math
import functools

import jax
import jax.numpy as jnp
from jax.experimental import pallas as pl
from jax.experimental.pallas import tpu as pltpu


def cross_attention_kernel(q_ref, c_ref, wqkv_ref, wo_ref, wp_ref, bias_ref, o_ref,
                           *, num_heads: int, eps: float, fuse_qkv: bool):
    Bt, Lq, Dq = q_ref.shape
    _, Lkv, Dkv = c_ref.shape
    hd = Dq // num_heads
    scale = 1.0 / math.sqrt(hd)
    mmt = wqkv_ref.dtype                     # matmul dtype: bf16 fast path or fp32

    # ---- packed small operands: one (8, 2*Dq) VMEM tile instead of six (1, D) inputs ----
    bias = bias_ref[...]                     # fp32
    bq, bkv = bias[0:1, :Dq], bias[1:2, :]
    bo, bp = bias[2:3, :Dq], bias[3:4, :Dq]
    lnw, lnb = bias[4:5, :Dq], bias[5:6, :Dq]

    # Flatten batch*seq rows -> bigger M on every MXU matmul.
    q = q_ref[...].reshape(Bt * Lq, Dq)      # fp32, reused exactly for the residual
    q_mm = q.astype(mmt)
    c_mm = c_ref[...].reshape(Bt * Lkv, Dkv).astype(mmt)

    # ---- Q/K/V projections (MXU) ----
    if fuse_qkv:
        # Small-M regime: one (Mq+Mc, D) x (D, 3*Dq) matmul; the unused quadrants are
        # free FLOPs while the MXU is row-starved. Lane-dense 3*Dq output.
        rows = jnp.concatenate([q_mm, c_mm], axis=0)
        qkv = jnp.dot(rows, wqkv_ref[...], preferred_element_type=jnp.float32)
        qp = qkv[:Bt * Lq, :Dq] + bq
        kv = qkv[Bt * Lq:, Dq:] + bkv
    else:
        qp = jnp.dot(q_mm, wqkv_ref[:, :Dq], preferred_element_type=jnp.float32) + bq
        kv = jnp.dot(c_mm, wqkv_ref[:, Dq:], preferred_element_type=jnp.float32) + bkv

    qp3 = qp.reshape(Bt, Lq, Dq).astype(mmt)
    kp3 = kv[:, :Dq].reshape(Bt, Lkv, Dq).astype(mmt)
    vp3 = kv[:, Dq:].reshape(Bt, Lkv, Dq).astype(mmt)

    # ---- per-head attention with W_o folded into the head loop (no concat) ----
    attn_out = None
    for h in range(num_heads):               # static unroll, static slices, no gather
        sl = slice(h * hd, (h + 1) * hd)
        qh, kh, vh = qp3[:, :, sl], kp3[:, :, sl], vp3[:, :, sl]
        s = jnp.einsum("bqd,bkd->bqk", qh, kh,
                       preferred_element_type=jnp.float32) * scale
        s = s - jnp.max(s, axis=-1, keepdims=True)
        p = jnp.exp(s)                        # fp32 softmax
        p = p * pl.reciprocal(jnp.sum(p, axis=-1, keepdims=True), approx=True)
        head = jnp.einsum("bqk,bkd->bqd", p.astype(mmt), vh,
                          preferred_element_type=jnp.float32)       # (Bt, Lq, hd)
        part = jnp.dot(head.reshape(Bt * Lq, hd).astype(mmt), wo_ref[sl, :],
                       preferred_element_type=jnp.float32)
        attn_out = (part + bo) if attn_out is None else (attn_out + part)

    # ---- proj = Linear -> ReLU -> Dropout(identity in eval) ----
    proj = jnp.dot(attn_out.astype(mmt), wp_ref[...],
                   preferred_element_type=jnp.float32) + bp
    proj = jnp.maximum(proj, 0.0)

    # ---- residual + LayerNorm over last dim (fp32, biased variance) ----
    resid = q + proj
    mean = jnp.mean(resid, axis=-1, keepdims=True)
    cen = resid - mean
    var = jnp.mean(cen * cen, axis=-1, keepdims=True)
    out = cen * jax.lax.rsqrt(var + eps) * lnw + lnb
    o_ref[...] = out.reshape(Bt, Lq, Dq).astype(o_ref.dtype)


def _pick_batch_tile(B, Lq, rows_target=256, split_rows_min=128):
    """Largest divisor Bt of B with Bt*Lq <= rows_target (fills MXU rows, amortizes the
    ~0.35us per-grid-step overhead). Only keep >= 2 grid steps (useful for v7x's 2
    TensorCores) when each step still gets >= split_rows_min rows of M; never starve the
    matmuls on single-TC v5e/v6e-sized work."""
    divisors = [d for d in range(1, B + 1) if B % d == 0]
    fitting = [d for d in divisors if d * Lq <= rows_target] or [1]
    bt = max(fitting)
    if B // bt < 2:
        for d in sorted(fitting, reverse=True):
            if B // d >= 2 and d * Lq >= split_rows_min:
                bt = d
                break
    return bt


def cross_attention_forward(query, context, params, num_heads, *,
                            batch_tile=None, use_bf16=True, eps=1e-5):
    B, Lq, Dq = query.shape
    Bc, Lkv, Dkv = context.shape
    assert Bc == B and Dq % num_heads == 0
    # TODO(synk): kdim/vdim != embed_dim would need separate wq / wkv inputs (no packed QKV).
    assert Dq == Dkv

    Bt = batch_tile if batch_tile is not None else _pick_batch_tile(B, Lq)
    assert B % Bt == 0

    w_dtype = jnp.bfloat16 if use_bf16 else jnp.float32
    # Glue: PyTorch (out,in) weights -> (in,out); Q|K|V packed into one lane-dense weight.
    # (If loading a real nn.MultiheadAttention with packed in_proj_weight, split its rows
    #  as [q; k; v] blocks of size Dq each to obtain wq/wk/wv before calling this.)
    wqkv = jnp.concatenate([params["wq"].T, params["wk"].T, params["wv"].T],
                           axis=1).astype(w_dtype)            # (Dkv, 3*Dq)
    wo = params["wo"].T.astype(w_dtype)                       # (Dq, Dq)
    wp = params["wp"].T.astype(w_dtype)                       # (Dq, Dq)

    # All (1, D) bias / LN-affine vectors packed into one (8, 2*Dq) fp32 tile (one DMA).
    bias = jnp.zeros((8, 2 * Dq), jnp.float32)
    bias = bias.at[0, :Dq].set(params["bq"])
    bias = bias.at[1, :Dq].set(params["bk"])
    bias = bias.at[1, Dq:].set(params["bv"])
    bias = bias.at[2, :Dq].set(params["bo"])
    bias = bias.at[3, :Dq].set(params["bp"])
    bias = bias.at[4, :Dq].set(params["ln_w"])
    bias = bias.at[5, :Dq].set(params["ln_b"])

    fuse_qkv = Bt * Lq < 128        # only fuse projections while the MXU is row-starved

    kernel = functools.partial(cross_attention_kernel, num_heads=num_heads,
                               eps=eps, fuse_qkv=fuse_qkv)

    # Explicit scoped-VMEM limit with headroom (defaults: 16 MiB v5e / 32 MiB v6e,v7x);
    # conservative over-estimate so it never becomes a tile-size ceiling.
    wbytes = (wqkv.size + wo.size + wp.size) * wqkv.dtype.itemsize + bias.size * 4
    tile_bytes = (2 * Bt * Lq * Dq + Bt * Lkv * Dkv) * 4
    vmem_limit = int(min(max(4 * (wbytes + tile_bytes) + (8 << 20), 32 << 20), 48 << 20))

    full = lambda shape: pl.BlockSpec(shape, lambda b: (0,) * len(shape))
    # NOTE: the constant-index weight specs could be single-buffered (pipeline_mode) to
    # reclaim VMEM on v7x if Dq grows; negligible at Dq=128 so left at the default.

    return pl.pallas_call(
        kernel,
        out_shape=jax.ShapeDtypeStruct((B, Lq, Dq), query.dtype),
        grid=(B // Bt,),
        in_specs=[
            pl.BlockSpec((Bt, Lq, Dq), lambda b: (b, 0, 0)),     # query block
            pl.BlockSpec((Bt, Lkv, Dkv), lambda b: (b, 0, 0)),   # context block
            full(wqkv.shape), full(wo.shape), full(wp.shape), full(bias.shape),
        ],
        out_specs=pl.BlockSpec((Bt, Lq, Dq), lambda b: (b, 0, 0)),
        compiler_params=pltpu.CompilerParams(
            dimension_semantics=("parallel",),
            vmem_limit_bytes=vmem_limit),
    )(query, context, wqkv, wo, wp, bias)


def reference_forward(query, context, params, num_heads, eps=1e-5):
    """Pure-JAX fp32 reference mirroring PyTorch eval-mode semantics."""
    Dq = query.shape[-1]
    hd = Dq // num_heads
    qp = query @ params["wq"].T + params["bq"]
    kp = context @ params["wk"].T + params["bk"]
    vp = context @ params["wv"].T + params["bv"]

    def split(x):  # (B, L, D) -> (B, H, L, hd)
        B, L, _ = x.shape
        return x.reshape(B, L, num_heads, hd).transpose(0, 2, 1, 3)

    qh, kh, vh = split(qp), split(kp), split(vp)
    s = jnp.einsum("bhqd,bhkd->bhqk", qh, kh) / math.sqrt(hd)
    p = jax.nn.softmax(s, axis=-1)
    ah = jnp.einsum("bhqk,bhkd->bhqd", p, vh)
    B, H, Lq, _ = ah.shape
    attn = ah.transpose(0, 2, 1, 3).reshape(B, Lq, Dq)
    attn_out = attn @ params["wo"].T + params["bo"]
    proj = jnp.maximum(attn_out @ params["wp"].T + params["bp"], 0.0)
    resid = query + proj
    mean = jnp.mean(resid, axis=-1, keepdims=True)
    var = jnp.mean((resid - mean) ** 2, axis=-1, keepdims=True)
    return (resid - mean) / jnp.sqrt(var + eps) * params["ln_w"] + params["ln_b"]


if __name__ == "__main__":
    # Small shapes consistent with the module: dim_q = dim_kv = 128, num_heads = 4.
    B, Lq, Lkv = 2, 8, 8
    Dq = Dkv = 128
    H = 4

    key = jax.random.PRNGKey(0)
    ks = jax.random.split(key, 12)

    def w(k, shape, scale=0.05):
        return (scale * jax.random.normal(k, shape)).astype(jnp.float32)

    params = {
        # PyTorch convention: weight shape = (out_features, in_features)
        "wq": w(ks[0], (Dq, Dq)),   "bq": w(ks[1], (Dq,)),
        "wk": w(ks[2], (Dq, Dkv)),  "bk": w(ks[3], (Dq,)),
        "wv": w(ks[4], (Dq, Dkv)),  "bv": w(ks[5], (Dq,)),
        "wo": w(ks[6], (Dq, Dq)),   "bo": w(ks[7], (Dq,)),
        "wp": w(ks[8], (Dq, Dq)),   "bp": w(ks[9], (Dq,)),
        "ln_w": jnp.ones((Dq,), jnp.float32),
        "ln_b": jnp.zeros((Dq,), jnp.float32),
    }

    query = jax.random.normal(ks[10], (B, Lq, Dq), dtype=jnp.float32)
    context = jax.random.normal(ks[11], (B, Lkv, Dkv), dtype=jnp.float32)

    ref = reference_forward(query, context, params, num_heads=H)

    # fp32 MXU path: tight parity (only the approx-reciprocal softmax denominator differs).
    out_f32 = cross_attention_forward(query, context, params, num_heads=H, use_bf16=False)
    out_f32 = jax.block_until_ready(out_f32)
    assert out_f32.shape == (B, Lq, Dq)
    assert jnp.allclose(out_f32, ref, atol=2e-3, rtol=2e-3), "fp32 path mismatch vs reference"

    # bf16 MXU fast path (fp32 accumulation; softmax/residual/LayerNorm stay fp32).
    out_bf16 = cross_attention_forward(query, context, params, num_heads=H, use_bf16=True)
    out_bf16 = jax.block_until_ready(out_bf16)
    assert jnp.allclose(out_bf16, ref, atol=2e-2, rtol=2e-2), "bf16 path mismatch vs reference"

    print("KERNEL_OK")
</pallas_src>

<mosaic_0001>
module attributes {stable_mosaic.version = 11 : i64} {
  func.func @cross_attention_kernel(%arg0: i32, %arg1: memref<2x8x128xf32, #tpu.memory_space<vmem>>, %arg2: memref<2x8x128xf32, #tpu.memory_space<vmem>>, %arg3: memref<128x384xf32, #tpu.memory_space<vmem>>, %arg4: memref<128x128xf32, #tpu.memory_space<vmem>>, %arg5: memref<128x128xf32, #tpu.memory_space<vmem>>, %arg6: memref<8x256xf32, #tpu.memory_space<vmem>>, %arg7: memref<2x8x128xf32, #tpu.memory_space<vmem>>) attributes {dimension_semantics = [#tpu.dimension_semantics<parallel>], iteration_bounds = array<i64: 1>, scalar_prefetch = 0 : i64, scratch_operands = 0 : i64, tpu.core_type = #tpu.core_type<tc>, window_params = [{transform_indices = @transform_0, window_bounds = array<i64: 2, 8, 128>}, {transform_indices = @transform_1, window_bounds = array<i64: 2, 8, 128>}, {pipeline_mode = #tpu.pipeline_mode<synchronous>, transform_indices = @transform_2, window_bounds = array<i64: 128, 384>}, {pipeline_mode = #tpu.pipeline_mode<synchronous>, transform_indices = @transform_3, window_bounds = array<i64: 128, 128>}, {pipeline_mode = #tpu.pipeline_mode<synchronous>, transform_indices = @transform_4, window_bounds = array<i64: 128, 128>}, {pipeline_mode = #tpu.pipeline_mode<synchronous>, transform_indices = @transform_5, window_bounds = array<i64: 8, 256>}, {transform_indices = @transform_6, window_bounds = array<i64: 2, 8, 128>}]} {
    %c0 = arith.constant 0 : index
    %c0_0 = arith.constant 0 : index
    %0 = vector.load %arg6[%c0, %c0_0] : memref<8x256xf32, #tpu.memory_space<vmem>>, vector<8x256xf32>
    %1 = vector.extract_strided_slice %0 {offsets = [0, 0], sizes = [1, 128], strides = [1, 1]} : vector<8x256xf32> to vector<1x128xf32>
    %2 = vector.extract_strided_slice %0 {offsets = [1, 0], sizes = [1, 256], strides = [1, 1]} : vector<8x256xf32> to vector<1x256xf32>
    %3 = vector.extract_strided_slice %0 {offsets = [2, 0], sizes = [1, 128], strides = [1, 1]} : vector<8x256xf32> to vector<1x128xf32>
    %4 = vector.extract_strided_slice %0 {offsets = [3, 0], sizes = [1, 128], strides = [1, 1]} : vector<8x256xf32> to vector<1x128xf32>
    %5 = vector.extract_strided_slice %0 {offsets = [4, 0], sizes = [1, 128], strides = [1, 1]} : vector<8x256xf32> to vector<1x128xf32>
    %6 = vector.extract_strided_slice %0 {offsets = [5, 0], sizes = [1, 128], strides = [1, 1]} : vector<8x256xf32> to vector<1x128xf32>
    %c0_1 = arith.constant 0 : index
    %c0_2 = arith.constant 0 : index
    %c0_3 = arith.constant 0 : index
    %7 = vector.load %arg1[%c0_1, %c0_2, %c0_3] : memref<2x8x128xf32, #tpu.memory_space<vmem>>, vector<2x8x128xf32>
    %8 = vector.shape_cast %7 : vector<2x8x128xf32> to vector<16x128xf32>
    %c0_4 = arith.constant 0 : index
    %c0_5 = arith.constant 0 : index
    %c0_6 = arith.constant 0 : index
    %9 = vector.load %arg2[%c0_4, %c0_5, %c0_6] : memref<2x8x128xf32, #tpu.memory_space<vmem>>, vector<2x8x128xf32>
    %10 = vector.shape_cast %9 : vector<2x8x128xf32> to vector<16x128xf32>
    %11 = tpu.concatenate %8, %10 in 0 : vector<16x128xf32>, vector<16x128xf32> -> vector<32x128xf32>
    %c0_7 = arith.constant 0 : index
    %c0_8 = arith.constant 0 : index
    %12 = vector.load %arg3[%c0_7, %c0_8] : memref<128x384xf32, #tpu.memory_space<vmem>>, vector<128x384xf32>
    %cst = arith.constant dense<0.000000e+00> : vector<32x384xf32>
    %13 = tpu.matmul %11, %12, %cst {dimension_numbers = #tpu.dot_dimension_numbers<[1], [0], [0], [1], [0, 0, 1, 1], [], []>} : vector<32x128xf32>, vector<128x384xf32>, vector<32x384xf32> -> vector<32x384xf32>
    %14 = vector.extract_strided_slice %13 {offsets = [0, 0], sizes = [16, 128], strides = [1, 1]} : vector<32x384xf32> to vector<16x128xf32>
    %15 = vector.broadcast %1 : vector<1x128xf32> to vector<16x128xf32>
    %16 = arith.addf %14, %15 : vector<16x128xf32>
    %17 = vector.extract_strided_slice %13 {offsets = [16, 128], sizes = [16, 256], strides = [1, 1]} : vector<32x384xf32> to vector<16x256xf32>
    %18 = vector.broadcast %2 : vector<1x256xf32> to vector<16x256xf32>
    %19 = arith.addf %17, %18 : vector<16x256xf32>
    %20 = vector.shape_cast %16 : vector<16x128xf32> to vector<2x8x128xf32>
    %21 = vector.extract_strided_slice %19 {offsets = [0, 0], sizes = [16, 128], strides = [1, 1]} : vector<16x256xf32> to vector<16x128xf32>
    %22 = vector.shape_cast %21 : vector<16x128xf32> to vector<2x8x128xf32>
    %23 = vector.extract_strided_slice %19 {offsets = [0, 128], sizes = [16, 128], strides = [1, 1]} : vector<16x256xf32> to vector<16x128xf32>
    %24 = vector.shape_cast %23 : vector<16x128xf32> to vector<2x8x128xf32>
    %25 = vector.extract_strided_slice %20 {offsets = [0, 0, 0], sizes = [2, 8, 32], strides = [1, 1, 1]} : vector<2x8x128xf32> to vector<2x8x32xf32>
    %26 = vector.extract_strided_slice %22 {offsets = [0, 0, 0], sizes = [2, 8, 32], strides = [1, 1, 1]} : vector<2x8x128xf32> to vector<2x8x32xf32>
    %27 = vector.extract_strided_slice %24 {offsets = [0, 0, 0], sizes = [2, 8, 32], strides = [1, 1, 1]} : vector<2x8x128xf32> to vector<2x8x32xf32>
    "tpu.trace_start"() <{level = 10 : i32, message = "bqd,bkd->bqk"}> : () -> ()
    %cst_9 = arith.constant dense<0.000000e+00> : vector<2x8x8xf32>
    %28 = tpu.matmul %25, %26, %cst_9 {dimension_numbers = #tpu.dot_dimension_numbers<[2], [2], [1], [1], [0, 0, 0, 1, 1, 1], [0], [0]>} : vector<2x8x32xf32>, vector<2x8x32xf32>, vector<2x8x8xf32> -> vector<2x8x8xf32>
    "tpu.trace_stop"() : () -> ()
    %cst_10 = arith.constant 0.176776692 : f32
    %29 = vector.broadcast %cst_10 : f32 to vector<2x8x8xf32>
    %30 = arith.mulf %28, %29 : vector<2x8x8xf32>
    %cst_11 = arith.constant dense<0xFF800000> : vector<2x8xf32>
    %31 = vector.multi_reduction <maximumf>, %30, %cst_11 [2] : vector<2x8x8xf32> to vector<2x8xf32>
    %32 = vector.shape_cast %31 : vector<2x8xf32> to vector<2x8x1xf32>
    %33 = vector.broadcast %32 : vector<2x8x1xf32> to vector<2x8x8xf32>
    %34 = arith.subf %30, %33 : vector<2x8x8xf32>
    %35 = math.exp %34 : vector<2x8x8xf32>
    %cst_12 = arith.constant dense<0.000000e+00> : vector<2x8xf32>
    %36 = vector.multi_reduction <add>, %35, %cst_12 [2] : vector<2x8x8xf32> to vector<2x8xf32>
    %37 = vector.shape_cast %36 : vector<2x8xf32> to vector<2x8x1xf32>
    %38 = tpu.reciprocal %37 {approx = true} : vector<2x8x1xf32> -> vector<2x8x1xf32>
    %39 = vector.broadcast %38 : vector<2x8x1xf32> to vector<2x8x8xf32>
    %40 = arith.mulf %35, %39 : vector<2x8x8xf32>
    "tpu.trace_start"() <{level = 10 : i32, message = "bqk,bkd->bqd"}> : () -> ()
    %cst_13 = arith.constant dense<0.000000e+00> : vector<2x8x32xf32>
    %41 = tpu.matmul %40, %27, %cst_13 {dimension_numbers = #tpu.dot_dimension_numbers<[2], [1], [1], [2], [0, 0, 0, 1, 1, 2], [0], [0]>} : vector<2x8x8xf32>, vector<2x8x32xf32>, vector<2x8x32xf32> -> vector<2x8x32xf32>
    "tpu.trace_stop"() : () -> ()
    %42 = vector.shape_cast %41 : vector<2x8x32xf32> to vector<16x32xf32>
    %c0_14 = arith.constant 0 : index
    %c0_15 = arith.constant 0 : index
    %43 = vector.load %arg4[%c0_14, %c0_15] : memref<128x128xf32, #tpu.memory_space<vmem>>, vector<32x128xf32>
    %cst_16 = arith.constant dense<0.000000e+00> : vector<16x128xf32>
    %44 = tpu.matmul %42, %43, %cst_16 {dimension_numbers = #tpu.dot_dimension_numbers<[1], [0], [0], [1], [0, 0, 1, 1], [], []>} : vector<16x32xf32>, vector<32x128xf32>, vector<16x128xf32> -> vector<16x128xf32>
    %45 = vector.broadcast %3 : vector<1x128xf32> to vector<16x128xf32>
    %46 = arith.addf %44, %45 : vector<16x128xf32>
    %47 = vector.extract_strided_slice %20 {offsets = [0, 0, 32], sizes = [2, 8, 32], strides = [1, 1, 1]} : vector<2x8x128xf32> to vector<2x8x32xf32>
    %48 = vector.extract_strided_slice %22 {offsets = [0, 0, 32], sizes = [2, 8, 32], strides = [1, 1, 1]} : vector<2x8x128xf32> to vector<2x8x32xf32>
    %49 = vector.extract_strided_slice %24 {offsets = [0, 0, 32], sizes = [2, 8, 32], strides = [1, 1, 1]} : vector<2x8x128xf32> to vector<2x8x32xf32>
    "tpu.trace_start"() <{level = 10 : i32, message = "bqd,bkd->bqk"}> : () -> ()
    %cst_17 = arith.constant dense<0.000000e+00> : vector<2x8x8xf32>
    %50 = tpu.matmul %47, %48, %cst_17 {dimension_numbers = #tpu.dot_dimension_numbers<[2], [2], [1], [1], [0, 0, 0, 1, 1, 1], [0], [0]>} : vector<2x8x32xf32>, vector<2x8x32xf32>, vector<2x8x8xf32> -> vector<2x8x8xf32>
    "tpu.trace_stop"() : () -> ()
    %cst_18 = arith.constant 0.176776692 : f32
    %51 = vector.broadcast %cst_18 : f32 to vector<2x8x8xf32>
    %52 = arith.mulf %50, %51 : vector<2x8x8xf32>
    %cst_19 = arith.constant dense<0xFF800000> : vector<2x8xf32>
    %53 = vector.multi_reduction <maximumf>, %52, %cst_19 [2] : vector<2x8x8xf32> to vector<2x8xf32>
    %54 = vector.shape_cast %53 : vector<2x8xf32> to vector<2x8x1xf32>
    %55 = vector.broadcast %54 : vector<2x8x1xf32> to vector<2x8x8xf32>
    %56 = arith.subf %52, %55 : vector<2x8x8xf32>
    %57 = math.exp %56 : vector<2x8x8xf32>
    %cst_20 = arith.constant dense<0.000000e+00> : vector<2x8xf32>
    %58 = vector.multi_reduction <add>, %57, %cst_20 [2] : vector<2x8x8xf32> to vector<2x8xf32>
    %59 = vector.shape_cast %58 : vector<2x8xf32> to vector<2x8x1xf32>
    %60 = tpu.reciprocal %59 {approx = true} : vector<2x8x1xf32> -> vector<2x8x1xf32>
    %61 = vector.broadcast %60 : vector<2x8x1xf32> to vector<2x8x8xf32>
    %62 = arith.mulf %57, %61 : vector<2x8x8xf32>
    "tpu.trace_start"() <{level = 10 : i32, message = "bqk,bkd->bqd"}> : () -> ()
    %cst_21 = arith.constant dense<0.000000e+00> : vector<2x8x32xf32>
    %63 = tpu.matmul %62, %49, %cst_21 {dimension_numbers = #tpu.dot_dimension_numbers<[2], [1], [1], [2], [0, 0, 0, 1, 1, 2], [0], [0]>} : vector<2x8x8xf32>, vector<2x8x32xf32>, vector<2x8x32xf32> -> vector<2x8x32xf32>
    "tpu.trace_stop"() : () -> ()
    %64 = vector.shape_cast %63 : vector<2x8x32xf32> to vector<16x32xf32>
    %c32 = arith.constant 32 : index
    %c0_22 = arith.constant 0 : index
    %65 = vector.load %arg4[%c32, %c0_22] : memref<128x128xf32, #tpu.memory_space<vmem>>, vector<32x128xf32>
    %cst_23 = arith.constant dense<0.000000e+00> : vector<16x128xf32>
    %66 = tpu.matmul %64, %65, %cst_23 {dimension_numbers = #tpu.dot_dimension_numbers<[1], [0], [0], [1], [0, 0, 1, 1], [], []>} : vector<16x32xf32>, vector<32x128xf32>, vector<16x128xf32> -> vector<16x128xf32>
    %67 = arith.addf %46, %66 : vector<16x128xf32>
    %68 = vector.extract_strided_slice %20 {offsets = [0, 0, 64], sizes = [2, 8, 32], strides = [1, 1, 1]} : vector<2x8x128xf32> to vector<2x8x32xf32>
    %69 = vector.extract_strided_slice %22 {offsets = [0, 0, 64], sizes = [2, 8, 32], strides = [1, 1, 1]} : vector<2x8x128xf32> to vector<2x8x32xf32>
    %70 = vector.extract_strided_slice %24 {offsets = [0, 0, 64], sizes = [2, 8, 32], strides = [1, 1, 1]} : vector<2x8x128xf32> to vector<2x8x32xf32>
    "tpu.trace_start"() <{level = 10 : i32, message = "bqd,bkd->bqk"}> : () -> ()
    %cst_24 = arith.constant dense<0.000000e+00> : vector<2x8x8xf32>
    %71 = tpu.matmul %68, %69, %cst_24 {dimension_numbers = #tpu.dot_dimension_numbers<[2], [2], [1], [1], [0, 0, 0, 1, 1, 1], [0], [0]>} : vector<2x8x32xf32>, vector<2x8x32xf32>, vector<2x8x8xf32> -> vector<2x8x8xf32>
    "tpu.trace_stop"() : () -> ()
    %cst_25 = arith.constant 0.176776692 : f32
    %72 = vector.broadcast %cst_25 : f32 to vector<2x8x8xf32>
    %73 = arith.mulf %71, %72 : vector<2x8x8xf32>
    %cst_26 = arith.constant dense<0xFF800000> : vector<2x8xf32>
    %74 = vector.multi_reduction <maximumf>, %73, %cst_26 [2] : vector<2x8x8xf32> to vector<2x8xf32>
    %75 = vector.shape_cast %74 : vector<2x8xf32> to vector<2x8x1xf32>
    %76 = vector.broadcast %75 : vector<2x8x1xf32> to vector<2x8x8xf32>
    %77 = arith.subf %73, %76 : vector<2x8x8xf32>
    %78 = math.exp %77 : vector<2x8x8xf32>
    %cst_27 = arith.constant dense<0.000000e+00> : vector<2x8xf32>
    %79 = vector.multi_reduction <add>, %78, %cst_27 [2] : vector<2x8x8xf32> to vector<2x8xf32>
    %80 = vector.shape_cast %79 : vector<2x8xf32> to vector<2x8x1xf32>
    %81 = tpu.reciprocal %80 {approx = true} : vector<2x8x1xf32> -> vector<2x8x1xf32>
    %82 = vector.broadcast %81 : vector<2x8x1xf32> to vector<2x8x8xf32>
    %83 = arith.mulf %78, %82 : vector<2x8x8xf32>
    "tpu.trace_start"() <{level = 10 : i32, message = "bqk,bkd->bqd"}> : () -> ()
    %cst_28 = arith.constant dense<0.000000e+00> : vector<2x8x32xf32>
    %84 = tpu.matmul %83, %70, %cst_28 {dimension_numbers = #tpu.dot_dimension_numbers<[2], [1], [1], [2], [0, 0, 0, 1, 1, 2], [0], [0]>} : vector<2x8x8xf32>, vector<2x8x32xf32>, vector<2x8x32xf32> -> vector<2x8x32xf32>
    "tpu.trace_stop"() : () -> ()
    %85 = vector.shape_cast %84 : vector<2x8x32xf32> to vector<16x32xf32>
    %c64 = arith.constant 64 : index
    %c0_29 = arith.constant 0 : index
    %86 = vector.load %arg4[%c64, %c0_29] : memref<128x128xf32, #tpu.memory_space<vmem>>, vector<32x128xf32>
    %cst_30 = arith.constant dense<0.000000e+00> : vector<16x128xf32>
    %87 = tpu.matmul %85, %86, %cst_30 {dimension_numbers = #tpu.dot_dimension_numbers<[1], [0], [0], [1], [0, 0, 1, 1], [], []>} : vector<16x32xf32>, vector<32x128xf32>, vector<16x128xf32> -> vector<16x128xf32>
    %88 = arith.addf %67, %87 : vector<16x128xf32>
    %89 = vector.extract_strided_slice %20 {offsets = [0, 0, 96], sizes = [2, 8, 32], strides = [1, 1, 1]} : vector<2x8x128xf32> to vector<2x8x32xf32>
    %90 = vector.extract_strided_slice %22 {offsets = [0, 0, 96], sizes = [2, 8, 32], strides = [1, 1, 1]} : vector<2x8x128xf32> to vector<2x8x32xf32>
    %91 = vector.extract_strided_slice %24 {offsets = [0, 0, 96], sizes = [2, 8, 32], strides = [1, 1, 1]} : vector<2x8x128xf32> to vector<2x8x32xf32>
    "tpu.trace_start"() <{level = 10 : i32, message = "bqd,bkd->bqk"}> : () -> ()
    %cst_31 = arith.constant dense<0.000000e+00> : vector<2x8x8xf32>
    %92 = tpu.matmul %89, %90, %cst_31 {dimension_numbers = #tpu.dot_dimension_numbers<[2], [2], [1], [1], [0, 0, 0, 1, 1, 1], [0], [0]>} : vector<2x8x32xf32>, vector<2x8x32xf32>, vector<2x8x8xf32> -> vector<2x8x8xf32>
    "tpu.trace_stop"() : () -> ()
    %cst_32 = arith.constant 0.176776692 : f32
    %93 = vector.broadcast %cst_32 : f32 to vector<2x8x8xf32>
    %94 = arith.mulf %92, %93 : vector<2x8x8xf32>
    %cst_33 = arith.constant dense<0xFF800000> : vector<2x8xf32>
    %95 = vector.multi_reduction <maximumf>, %94, %cst_33 [2] : vector<2x8x8xf32> to vector<2x8xf32>
    %96 = vector.shape_cast %95 : vector<2x8xf32> to vector<2x8x1xf32>
    %97 = vector.broadcast %96 : vector<2x8x1xf32> to vector<2x8x8xf32>
    %98 = arith.subf %94, %97 : vector<2x8x8xf32>
    %99 = math.exp %98 : vector<2x8x8xf32>
    %cst_34 = arith.constant dense<0.000000e+00> : vector<2x8xf32>
    %100 = vector.multi_reduction <add>, %99, %cst_34 [2] : vector<2x8x8xf32> to vector<2x8xf32>
    %101 = vector.shape_cast %100 : vector<2x8xf32> to vector<2x8x1xf32>
    %102 = tpu.reciprocal %101 {approx = true} : vector<2x8x1xf32> -> vector<2x8x1xf32>
    %103 = vector.broadcast %102 : vector<2x8x1xf32> to vector<2x8x8xf32>
    %104 = arith.mulf %99, %103 : vector<2x8x8xf32>
    "tpu.trace_start"() <{level = 10 : i32, message = "bqk,bkd->bqd"}> : () -> ()
    %cst_35 = arith.constant dense<0.000000e+00> : vector<2x8x32xf32>
    %105 = tpu.matmul %104, %91, %cst_35 {dimension_numbers = #tpu.dot_dimension_numbers<[2], [1], [1], [2], [0, 0, 0, 1, 1, 2], [0], [0]>} : vector<2x8x8xf32>, vector<2x8x32xf32>, vector<2x8x32xf32> -> vector<2x8x32xf32>
    "tpu.trace_stop"() : () -> ()
    %106 = vector.shape_cast %105 : vector<2x8x32xf32> to vector<16x32xf32>
    %c96 = arith.constant 96 : index
    %c0_36 = arith.constant 0 : index
    %107 = vector.load %arg4[%c96, %c0_36] : memref<128x128xf32, #tpu.memory_space<vmem>>, vector<32x128xf32>
    %cst_37 = arith.constant dense<0.000000e+00> : vector<16x128xf32>
    %108 = tpu.matmul %106, %107, %cst_37 {dimension_numbers = #tpu.dot_dimension_numbers<[1], [0], [0], [1], [0, 0, 1, 1], [], []>} : vector<16x32xf32>, vector<32x128xf32>, vector<16x128xf32> -> vector<16x128xf32>
    %109 = arith.addf %88, %108 : vector<16x128xf32>
    %c0_38 = arith.constant 0 : index
    %c0_39 = arith.constant 0 : index
    %110 = vector.load %arg5[%c0_38, %c0_39] : memref<128x128xf32, #tpu.memory_space<vmem>>, vector<128x128xf32>
    %cst_40 = arith.constant dense<0.000000e+00> : vector<16x128xf32>
    %111 = tpu.matmul %109, %110, %cst_40 {dimension_numbers = #tpu.dot_dimension_numbers<[1], [0], [0], [1], [0, 0, 1, 1], [], []>} : vector<16x128xf32>, vector<128x128xf32>, vector<16x128xf32> -> vector<16x128xf32>
    %112 = vector.broadcast %4 : vector<1x128xf32> to vector<16x128xf32>
    %113 = arith.addf %111, %112 : vector<16x128xf32>
    %cst_41 = arith.constant 0.000000e+00 : f32
    %114 = vector.broadcast %cst_41 : f32 to vector<16x128xf32>
    %115 = arith.maximumf %113, %114 : vector<16x128xf32>
    %116 = arith.addf %8, %115 : vector<16x128xf32>
    %cst_42 = arith.constant dense<0.000000e+00> : vector<16xf32>
    %117 = vector.multi_reduction <add>, %116, %cst_42 [1] : vector<16x128xf32> to vector<16xf32>
    %118 = vector.shape_cast %117 : vector<16xf32> to vector<16x1xf32>
    %cst_43 = arith.constant 1.280000e+02 : f32
    %119 = vector.broadcast %cst_43 : f32 to vector<16x1xf32>
    %120 = arith.divf %118, %119 : vector<16x1xf32>
    %121 = vector.broadcast %120 : vector<16x1xf32> to vector<16x128xf32>
    %122 = arith.subf %116, %121 : vector<16x128xf32>
    %123 = arith.mulf %122, %122 : vector<16x128xf32>
    %cst_44 = arith.constant dense<0.000000e+00> : vector<16xf32>
    %124 = vector.multi_reduction <add>, %123, %cst_44 [1] : vector<16x128xf32> to vector<16xf32>
    %125 = vector.shape_cast %124 : vector<16xf32> to vector<16x1xf32>
    %cst_45 = arith.constant 1.280000e+02 : f32
    %126 = vector.broadcast %cst_45 : f32 to vector<16x1xf32>
    %127 = arith.divf %125, %126 : vector<16x1xf32>
    %cst_46 = arith.constant 9.99999974E-6 : f32
    %128 = vector.broadcast %cst_46 : f32 to vector<16x1xf32>
    %129 = arith.addf %127, %128 : vector<16x1xf32>
    %130 = math.rsqrt %129 : vector<16x1xf32>
    %131 = vector.broadcast %130 : vector<16x1xf32> to vector<16x128xf32>
    %132 = arith.mulf %122, %131 : vector<16x128xf32>
    %133 = vector.broadcast %5 : vector<1x128xf32> to vector<16x128xf32>
    %134 = arith.mulf %132, %133 : vector<16x128xf32>
    %135 = vector.broadcast %6 : vector<1x128xf32> to vector<16x128xf32>
    %136 = arith.addf %134, %135 : vector<16x128xf32>
    %137 = vector.shape_cast %136 : vector<16x128xf32> to vector<2x8x128xf32>
    %c0_47 = arith.constant 0 : index
    %c0_48 = arith.constant 0 : index
    %c0_49 = arith.constant 0 : index
    %138 = vector.load %arg7[%c0_47, %c0_48, %c0_49] : memref<2x8x128xf32, #tpu.memory_space<vmem>>, vector<2x8x128xf32>
    tpu.vector_store %arg7[%c0_47, %c0_48, %c0_49], %137 {strides = array<i32>} : memref<2x8x128xf32, #tpu.memory_space<vmem>>, vector<2x8x128xf32>,
    return
  }
  func.func @transform_0(%arg0: i32) -> (i32, i32, i32) {
    %c0_i32 = arith.constant 0 : i32
    %c0_i32_0 = arith.constant 0 : i32
    %c0_i32_1 = arith.constant 0 : i32
    return %arg0, %c0_i32, %c0_i32_0 : i32, i32, i32
  }
  func.func @transform_1(%arg0: i32) -> (i32, i32, i32) {
    %c0_i32 = arith.constant 0 : i32
    %c0_i32_0 = arith.constant 0 : i32
    %c0_i32_1 = arith.constant 0 : i32
    return %arg0, %c0_i32, %c0_i32_0 : i32, i32, i32
  }
  func.func @transform_2(%arg0: i32) -> (i32, i32) {
    %c0_i32 = arith.constant 0 : i32
    %c0_i32_0 = arith.constant 0 : i32
    %c0_i32_1 = arith.constant 0 : i32
    return %c0_i32, %c0_i32_0 : i32, i32
  }
  func.func @transform_3(%arg0: i32) -> (i32, i32) {
    %c0_i32 = arith.constant 0 : i32
    %c0_i32_0 = arith.constant 0 : i32
    %c0_i32_1 = arith.constant 0 : i32
    return %c0_i32, %c0_i32_0 : i32, i32
  }
  func.func @transform_4(%arg0: i32) -> (i32, i32) {
    %c0_i32 = arith.constant 0 : i32
    %c0_i32_0 = arith.constant 0 : i32
    %c0_i32_1 = arith.constant 0 : i32
    return %c0_i32, %c0_i32_0 : i32, i32
  }
  func.func @transform_5(%arg0: i32) -> (i32, i32) {
    %c0_i32 = arith.constant 0 : i32
    %c0_i32_0 = arith.constant 0 : i32
    %c0_i32_1 = arith.constant 0 : i32
    return %c0_i32, %c0_i32_0 : i32, i32
  }
  func.func @transform_6(%arg0: i32) -> (i32, i32, i32) {
    %c0_i32 = arith.constant 0 : i32
    %c0_i32_0 = arith.constant 0 : i32
    %c0_i32_1 = arith.constant 0 : i32
    return %arg0, %c0_i32, %c0_i32_0 : i32, i32, i32
  }
}

</mosaic_0001>

<llo_original>
// kernel: tpu_custom_call.1
$region0: #{tpu_custom_call.1}
  #allocation0 [shape = 'u32[]', space=smem, size = 0x4, offset = 0x4, fixed_abs, tag = 'smem constant byte address 0x4 - core index']
  #allocation1 [shape = 'u32[144,128]{1,0:T(1,128)}', space=vmem, size = 0x12000, scoped, tag = 'internal scratch']
  %s0 = inlined_call_operand.hbm [shape: f32[2,8,128], index: 0, kind: input, shape index: {}]
  %s1 = inlined_call_operand.hbm [shape: f32[2,8,128], index: 1, kind: input, shape index: {}]
  %s2 = inlined_call_operand.hbm [shape: f32[128,384], index: 2, kind: input, shape index: {}]
  %s3 = inlined_call_operand.hbm [shape: f32[128,128], index: 3, kind: input, shape index: {}]
  %s4 = inlined_call_operand.hbm [shape: f32[128,128], index: 4, kind: input, shape index: {}]
  %s5 = inlined_call_operand.hbm [shape: f32[8,256], index: 5, kind: input, shape index: {}]
  %s6 = inlined_call_operand.hbm [shape: f32[2,8,128], index: 6, kind: output, shape index: {}]
  %s7 = sld [smem:[#allocation0]]
  $region58: #{tpu_custom_call.1} parent=0
    _
  %s9 = ssub.s32 1, %s7
  %s10 = scalar_select 0, %s9, %s7
  $region1: #{tpu_custom_call.1} parent=0
    #allocation2 [shape = 'u8[8192]{0}', space=vmem, size = 0x2000, scoped, tag = 'input window, operand 0, single buffered']
    #allocation3 [shape = 's32[1]{0}', space=sflag, size = 0x4, scoped, tag = 'scoped memory for tpu_custom_call.1']
    #allocation4 [shape = 's32[1]{0}', space=sflag, size = 0x4, scoped, tag = 'scoped memory for tpu_custom_call.1']
    #allocation5 [shape = 'u8[8192]{0}', space=vmem, size = 0x2000, scoped, tag = 'input window, operand 1, single buffered']
    #allocation6 [shape = 's32[1]{0}', space=sflag, size = 0x4, scoped, tag = 'scoped memory for tpu_custom_call.1']
    #allocation7 [shape = 'u8[196608]{0}', space=vmem, size = 0x30000, scoped, tag = 'input window, operand 2, single buffered']
    #allocation8 [shape = 'u8[65536]{0}', space=vmem, size = 0x10000, scoped, tag = 'input window, operand 3, single buffered']
    #allocation9 [shape = 's32[1]{0}', space=sflag, size = 0x4, scoped, tag = 'scoped memory for tpu_custom_call.1']
    #allocation10 [shape = 'u8[65536]{0}', space=vmem, size = 0x10000, scoped, tag = 'input window, operand 4, single buffered']
    #allocation11 [shape = 'u8[8192]{0}', space=vmem, size = 0x2000, scoped, tag = 'input window, operand 5, single buffered']
    #allocation12 [shape = 's32[1]{0}', space=sflag, size = 0x4, scoped, tag = 'scoped memory for tpu_custom_call.1']
    #allocation13 [shape = 'u8[8192]{0}', space=vmem, size = 0x2000, scoped, tag = 'output window, operand 0, single buffered']
    %11 = vsyncpa [#allocation3], 0
    %12 = vsyncpa [#allocation6], 0
    %13 = vsyncpa [#allocation9], 0
    %14 = vsyncpa [#allocation12], 0
    %15 = vsyncpa [#allocation4], 0
    // Predicated region
    $region2: #{tpu_custom_call.1} parent=1 // pred_check
      _
    $region3: #{tpu_custom_call.1} parent=1 // pred_check_branch
      %17 = sbr.rel (0) target = $region5
    $region4: #{tpu_custom_call.1} parent=1 // pred_region
      %s19 = ssub.s32 256, 256
      %20 = vsyncadd [#allocation3], %s19
      %s21 = sshll.u32 [#allocation2], 4
      %s22 = int_to_ptr.vmem [resolvable:$true] %s21
      %27 = dma.hbm_to_vmem [thread:$0]  %s0, 256, %s22, [#allocation3], 128, 128, 8
    $region5: #{tpu_custom_call.1} parent=1 // pred_fallthru
      _
    // Predicated region
    $region6: #{tpu_custom_call.1} parent=1 // pred_check
      _
    $region7: #{tpu_custom_call.1} parent=1 // pred_check_branch
      %29 = sbr.rel (0) target = $region9
    $region8: #{tpu_custom_call.1} parent=1 // pred_region
      %s31 = ssub.s32 256, 256
      %32 = vsyncadd [#allocation6], %s31
      %s33 = sshll.u32 [#allocation5], 4
      %s34 = int_to_ptr.vmem [resolvable:$true] %s33
      %39 = dma.hbm_to_vmem [thread:$0]  %s1, 256, %s34, [#allocation6], 128, 128, 8
    $region9: #{tpu_custom_call.1} parent=1 // pred_fallthru
      _
    // Predicated region
    $region10: #{tpu_custom_call.1} parent=1 // pred_check
      _
    $region11: #{tpu_custom_call.1} parent=1 // pred_check_branch
      %41 = sbr.rel (0) target = $region13
    $region12: #{tpu_custom_call.1} parent=1 // pred_region
      %s43 = ssub.s32 6144, 6144
      %44 = vsyncadd [#allocation6], %s43
      %s45 = sshll.u32 [#allocation7], 4
      %s46 = int_to_ptr.vmem [resolvable:$true] %s45
      %51 = dma.hbm_to_vmem [thread:$0]  %s2, 6144, %s46, [#allocation6], 384, 384, 24
    $region13: #{tpu_custom_call.1} parent=1 // pred_fallthru
      _
    // Predicated region
    $region14: #{tpu_custom_call.1} parent=1 // pred_check
      _
    $region15: #{tpu_custom_call.1} parent=1 // pred_check_branch
      %53 = sbr.rel (0) target = $region17
    $region16: #{tpu_custom_call.1} parent=1 // pred_region
      %s55 = ssub.s32 2048, 2048
      %56 = vsyncadd [#allocation9], %s55
      %s57 = sshll.u32 [#allocation8], 4
      %s58 = int_to_ptr.vmem [resolvable:$true] %s57
      %63 = dma.hbm_to_vmem [thread:$0]  %s3, 2048, %s58, [#allocation9], 128, 128, 8
    $region17: #{tpu_custom_call.1} parent=1 // pred_fallthru
      _
    // Predicated region
    $region18: #{tpu_custom_call.1} parent=1 // pred_check
      _
    $region19: #{tpu_custom_call.1} parent=1 // pred_check_branch
      %65 = sbr.rel (0) target = $region21
    $region20: #{tpu_custom_call.1} parent=1 // pred_region
      %s67 = ssub.s32 2048, 2048
      %68 = vsyncadd [#allocation9], %s67
      %s69 = sshll.u32 [#allocation10], 4
      %s70 = int_to_ptr.vmem [resolvable:$true] %s69
      %75 = dma.hbm_to_vmem [thread:$0]  %s4, 2048, %s70, [#allocation9], 128, 128, 8
    $region21: #{tpu_custom_call.1} parent=1 // pred_fallthru
      _
    // Predicated region
    $region22: #{tpu_custom_call.1} parent=1 // pred_check
      _
    $region23: #{tpu_custom_call.1} parent=1 // pred_check_branch
      %77 = sbr.rel (0) target = $region25
    $region24: #{tpu_custom_call.1} parent=1 // pred_region
      %s79 = ssub.s32 256, 256
      %80 = vsyncadd [#allocation12], %s79
      %s82 = sshll.u32 [#allocation11], 4
      %s83 = int_to_ptr.vmem [resolvable:$true] %s82
      %85 = dma.hbm_to_vmem [thread:$0]  %s5, 256, %s83, [#allocation12]
    $region25: #{tpu_custom_call.1} parent=1 // pred_fallthru
      _
    // Predicated region
    $region26: #{tpu_custom_call.1} parent=1 // pred_check
      _
    $region27: #{tpu_custom_call.1} parent=1 // pred_check_branch
      %87 = sbr.rel (0) target = $region29
    $region28: #{tpu_custom_call.1} parent=1 // pred_region
      %88 = dma.done [#allocation3], 256
    $region29: #{tpu_custom_call.1} parent=1 // pred_fallthru
      _
    // Predicated region
    $region30: #{tpu_custom_call.1} parent=1 // pred_check
      _
    $region31: #{tpu_custom_call.1} parent=1 // pred_check_branch
      %90 = sbr.rel (0) target = $region33
    $region32: #{tpu_custom_call.1} parent=1 // pred_region
      %91 = dma.done [#allocation6], 256
    $region33: #{tpu_custom_call.1} parent=1 // pred_fallthru
      _
    // Predicated region
    $region34: #{tpu_custom_call.1} parent=1 // pred_check
      _
    $region35: #{tpu_custom_call.1} parent=1 // pred_check_branch
      %93 = sbr.rel (0) target = $region37
    $region36: #{tpu_custom_call.1} parent=1 // pred_region
      %94 = dma.done [#allocation6], 6144
    $region37: #{tpu_custom_call.1} parent=1 // pred_fallthru
      _
    // Predicated region
    $region38: #{tpu_custom_call.1} parent=1 // pred_check
      _
    $region39: #{tpu_custom_call.1} parent=1 // pred_check_branch
      %96 = sbr.rel (0) target = $region41
    $region40: #{tpu_custom_call.1} parent=1 // pred_region
      %97 = dma.done [#allocation9], 2048
    $region41: #{tpu_custom_call.1} parent=1 // pred_fallthru
      _
    // Predicated region
    $region42: #{tpu_custom_call.1} parent=1 // pred_check
      _
    $region43: #{tpu_custom_call.1} parent=1 // pred_check_branch
      %99 = sbr.rel (0) target = $region45
    $region44: #{tpu_custom_call.1} parent=1 // pred_region
      %100 = dma.done [#allocation9], 2048
    $region45: #{tpu_custom_call.1} parent=1 // pred_fallthru
      _
    // Predicated region
    $region46: #{tpu_custom_call.1} parent=1 // pred_check
      _
    $region47: #{tpu_custom_call.1} parent=1 // pred_check_branch
      %102 = sbr.rel (0) target = $region49
    $region48: #{tpu_custom_call.1} parent=1 // pred_region
      %103 = dma.done [#allocation12], 256
    $region49: #{tpu_custom_call.1} parent=1 // pred_fallthru
      _
    %v104 = vld [vmem:[#allocation11] sm:$0xff]
    %v105 = vld [vmem:[#allocation11 + $0x8] sm:$0xff]
    %v106 = vld [vmem:[#allocation2] sm:$0xff]
    %v107 = vld [vmem:[#allocation2 + $0x8] sm:$0xff]
    %v108 = vld [vmem:[#allocation5] sm:$0xff]
    %v109 = vld [vmem:[#allocation5 + $0x8] sm:$0xff]
    %v110 = vld [vmem:[#allocation7] sm:$0xff]
    %v111 = vld [vmem:[#allocation7 + $0x8] sm:$0xff]
    %v112 = vld [vmem:[#allocation7 + $0x10] sm:$0xff]
    %v113 = vld [vmem:[#allocation7 + $0x18] sm:$0xff]
    %v114 = vld [vmem:[#allocation7 + $0x20] sm:$0xff]
    %v115 = vld [vmem:[#allocation7 + $0x28] sm:$0xff]
    %v116 = vld [vmem:[#allocation7 + $0x30] sm:$0xff]
    %v117 = vld [vmem:[#allocation7 + $0x38] sm:$0xff]
    %v118 = vld [vmem:[#allocation7 + $0x40] sm:$0xff]
    %v119 = vld [vmem:[#allocation7 + $0x48] sm:$0xff]
    %v120 = vld [vmem:[#allocation7 + $0x50] sm:$0xff]
    %v121 = vld [vmem:[#allocation7 + $0x58] sm:$0xff]
    %v122 = vld [vmem:[#allocation7 + $0x60] sm:$0xff]
    %v123 = vld [vmem:[#allocation7 + $0x68] sm:$0xff]
    %v124 = vld [vmem:[#allocation7 + $0x70] sm:$0xff]
    %v125 = vld [vmem:[#allocation7 + $0x78] sm:$0xff]
    %v126 = vld [vmem:[#allocation7 + $0x80] sm:$0xff]
    %v127 = vld [vmem:[#allocation7 + $0x88] sm:$0xff]
    %v128 = vld [vmem:[#allocation7 + $0x90] sm:$0xff]
    %v129 = vld [vmem:[#allocation7 + $0x98] sm:$0xff]
    %v130 = vld [vmem:[#allocation7 + $0xa0] sm:$0xff]
    %v131 = vld [vmem:[#allocation7 + $0xa8] sm:$0xff]
    %v132 = vld [vmem:[#allocation7 + $0xb0] sm:$0xff]
    %v133 = vld [vmem:[#allocation7 + $0xb8] sm:$0xff]
    %v134 = vld [vmem:[#allocation7 + $0xc0] sm:$0xff]
    %v135 = vld [vmem:[#allocation7 + $0xc8] sm:$0xff]
    %v136 = vld [vmem:[#allocation7 + $0xd0] sm:$0xff]
    %v137 = vld [vmem:[#allocation7 + $0xd8] sm:$0xff]
    %v138 = vld [vmem:[#allocation7 + $0xe0] sm:$0xff]
    %v139 = vld [vmem:[#allocation7 + $0xe8] sm:$0xff]
    %v140 = vld [vmem:[#allocation7 + $0xf0] sm:$0xff]
    %v141 = vld [vmem:[#allocation7 + $0xf8] sm:$0xff]
    %v142 = vld [vmem:[#allocation7 + $0x100] sm:$0xff]
    %v143 = vld [vmem:[#allocation7 + $0x108] sm:$0xff]
    %v144 = vld [vmem:[#allocation7 + $0x110] sm:$0xff]
    %v145 = vld [vmem:[#allocation7 + $0x118] sm:$0xff]
    %v146 = vld [vmem:[#allocation7 + $0x120] sm:$0xff]
    %v147 = vld [vmem:[#allocation7 + $0x128] sm:$0xff]
    %v148 = vld [vmem:[#allocation7 + $0x130] sm:$0xff]
    %v149 = vld [vmem:[#allocation7 + $0x138] sm:$0xff]
    %v150 = vld [vmem:[#allocation7 + $0x140] sm:$0xff]
    %v151 = vld [vmem:[#allocation7 + $0x148] sm:$0xff]
    %v152 = vld [vmem:[#allocation7 + $0x150] sm:$0xff]
    %v153 = vld [vmem:[#allocation7 + $0x158] sm:$0xff]
    %v154 = vld [vmem:[#allocation7 + $0x160] sm:$0xff]
    %v155 = vld [vmem:[#allocation7 + $0x168] sm:$0xff]
    %v156 = vld [vmem:[#allocation7 + $0x170] sm:$0xff]
    %v157 = vld [vmem:[#allocation7 + $0x178] sm:$0xff]
    %158 = vmatprep.subr.mxu0 %v156
    %159 = vmatpush1.msra.mxu0 %v155
    %160 = vmatprep.subr.mxu0 %v153
    %161 = vmatpush1.msra.mxu0 %v152
    %162 = vmatprep.subr.mxu0 %v150
    %163 = vmatpush1.msra.mxu0 %v149
    %164 = vmatprep.subr.mxu0 %v147
    %165 = vmatpush1.msra.mxu0 %v146
    %166 = vmatprep.subr.mxu0 %v144
    %167 = vmatpush1.msra.mxu0 %v143
    %168 = vmatprep.subr.mxu0 %v141
    %169 = vmatpush1.msra.mxu0 %v140
    %170 = vmatprep.subr.mxu0 %v138
    %171 = vmatpush1.msra.mxu0 %v137
    %172 = vmatprep.subr.mxu0 %v135
    %173 = vmatpush1.msra.mxu0 %v134
    %174 = vmatprep.subr.mxu0 %v132
    %175 = vmatpush1.msra.mxu0 %v131
    %176 = vmatprep.subr.mxu0 %v129
    %177 = vmatpush1.msra.mxu0 %v128
    %178 = vmatprep.subr.mxu0 %v126
    %179 = vmatpush1.msra.mxu0 %v125
    %180 = vmatprep.subr.mxu0 %v123
    %181 = vmatpush1.msra.mxu0 %v122
    %182 = vmatprep.subr.mxu0 %v120
    %183 = vmatpush1.msra.mxu0 %v119
    %184 = vmatprep.subr.mxu0 %v117
    %185 = vmatpush1.msra.mxu0 %v116
    %186 = vmatprep.subr.mxu0 %v114
    %187 = vmatpush1.msra.mxu0 %v113
    %188 = vmatprep.subr.mxu0 %v111
    %189 = vmatpush1.msra.mxu0 %v110
    %190 = vmatprep.subr.mxu0 0.0
    %191 = vmatpush2.msra.mxu0 0.0
    %192 = vmatprep.subr.mxu0 0.0
    %193 = vmatpush2.msra.mxu0 0.0
    %194 = vmatprep.subr.mxu0 0.0
    %195 = vmatpush2.msra.mxu0 0.0
    %196 = vmatprep.subr.mxu0 0.0
    %197 = vmatpush2.msra.mxu0 0.0
    %198 = vmatprep.subr.mxu0 0.0
    %199 = vmatpush2.msra.mxu0 0.0
    %200 = vmatprep.subr.mxu0 0.0
    %201 = vmatpush2.msra.mxu0 0.0
    %202 = vmatprep.subr.mxu0 0.0
    %203 = vmatpush2.msra.mxu0 0.0
    %204 = vmatprep.subr.mxu0 0.0
    %205 = vmatpush2.msra.mxu0 0.0
    %206 = vmatprep.subr.mxu0 0.0
    %207 = vmatpush2.msra.mxu0 0.0
    %208 = vmatprep.subr.mxu0 0.0
    %209 = vmatpush2.msra.mxu0 0.0
    %210 = vmatprep.subr.mxu0 0.0
    %211 = vmatpush2.msra.mxu0 0.0
    %212 = vmatprep.subr.mxu0 0.0
    %213 = vmatpush2.msra.mxu0 0.0
    %214 = vmatprep.subr.mxu0 0.0
    %215 = vmatpush2.msra.mxu0 0.0
    %216 = vmatprep.subr.mxu0 0.0
    %217 = vmatpush2.msra.mxu0 0.0
    %218 = vmatprep.subr.mxu0 0.0
    %219 = vmatpush2.msra.mxu0 0.0
    %220 = vmatprep.subr.mxu0 0.0
    %221 = vmatpush2.msra.mxu0 0.0
    %222 = vmatprep.mubr.f32.mxu0 0.0
    %223 = vmatmul.mubr.f32.gmra.mxu0 %v106
    %v224 = vpop.f32.mrf.mxu0
    %v225 = vadd.f32 0.0, %v224
    %v226 = vpop.f32.mrf.mxu0
    %227 = vmatprep.mubr.f32.mxu0 0.0
    %228 = vmatmul.mubr.f32.gmra.mxu0 %v107
    %v229 = vpop.f32.mrf.mxu0
    %v230 = vadd.f32 0.0, %v229
    %v231 = vpop.f32.mrf.mxu0
    %232 = vmatprep.mubr.f32.mxu0 0.0
    %233 = vmatmul.mubr.f32.gmra.mxu0 %v108
    %v234 = vpop.f32.mrf.mxu0
    %v235 = vpop.f32.mrf.mxu0
    %v236 = vadd.f32 0.0, %v235
    %237 = vmatprep.mubr.f32.mxu0 0.0
    %238 = vmatmul.mubr.f32.gmra.mxu0 %v109
    %v239 = vpop.f32.mrf.mxu0
    %v240 = vpop.f32.mrf.mxu0
    %v241 = vadd.f32 0.0, %v240
    %242 = vdwg.mxu0
    %243 = vmatprep.subr.mxu0 0.0
    %244 = vmatpush1.msra.mxu0 %v157
    %245 = vmatprep.subr.mxu0 0.0
    %246 = vmatpush1.msra.mxu0 %v154
    %247 = vmatprep.subr.mxu0 0.0
    %248 = vmatpush1.msra.mxu0 %v151
    %249 = vmatprep.subr.mxu0 0.0
    %250 = vmatpush1.msra.mxu0 %v148
    %251 = vmatprep.subr.mxu0 0.0
    %252 = vmatpush1.msra.mxu0 %v145
    %253 = vmatprep.subr.mxu0 0.0
    %254 = vmatpush1.msra.mxu0 %v142
    %255 = vmatprep.subr.mxu0 0.0
    %256 = vmatpush1.msra.mxu0 %v139
    %257 = vmatprep.subr.mxu0 0.0
    %258 = vmatpush1.msra.mxu0 %v136
    %259 = vmatprep.subr.mxu0 0.0
    %260 = vmatpush1.msra.mxu0 %v133
    %261 = vmatprep.subr.mxu0 0.0
    %262 = vmatpush1.msra.mxu0 %v130
    %263 = vmatprep.subr.mxu0 0.0
    %264 = vmatpush1.msra.mxu0 %v127
    %265 = vmatprep.subr.mxu0 0.0
    %266 = vmatpush1.msra.mxu0 %v124
    %267 = vmatprep.subr.mxu0 0.0
    %268 = vmatpush1.msra.mxu0 %v121
    %269 = vmatprep.subr.mxu0 0.0
    %270 = vmatpush1.msra.mxu0 %v118
    %271 = vmatprep.subr.mxu0 0.0
    %272 = vmatpush1.msra.mxu0 %v115
    %273 = vmatprep.subr.mxu0 0.0
    %274 = vmatpush1.msra.mxu0 %v112
    %275 = vmatprep.subr.mxu0 0.0
    %276 = vmatpush2.msra.mxu0 0.0
    %277 = vmatprep.subr.mxu0 0.0
    %278 = vmatpush2.msra.mxu0 0.0
    %279 = vmatprep.subr.mxu0 0.0
    %280 = vmatpush2.msra.mxu0 0.0
    %281 = vmatprep.subr.mxu0 0.0
    %282 = vmatpush2.msra.mxu0 0.0
    %283 = vmatprep.subr.mxu0 0.0
    %284 = vmatpush2.msra.mxu0 0.0
    %285 = vmatprep.subr.mxu0 0.0
    %286 = vmatpush2.msra.mxu0 0.0
    %287 = vmatprep.subr.mxu0 0.0
    %288 = vmatpush2.msra.mxu0 0.0
    %289 = vmatprep.subr.mxu0 0.0
    %290 = vmatpush2.msra.mxu0 0.0
    %291 = vmatprep.subr.mxu0 0.0
    %292 = vmatpush2.msra.mxu0 0.0
    %293 = vmatprep.subr.mxu0 0.0
    %294 = vmatpush2.msra.mxu0 0.0
    %295 = vmatprep.subr.mxu0 0.0
    %296 = vmatpush2.msra.mxu0 0.0
    %297 = vmatprep.subr.mxu0 0.0
    %298 = vmatpush2.msra.mxu0 0.0
    %299 = vmatprep.subr.mxu0 0.0
    %300 = vmatpush2.msra.mxu0 0.0
    %301 = vmatprep.subr.mxu0 0.0
    %302 = vmatpush2.msra.mxu0 0.0
    %303 = vmatprep.subr.mxu0 0.0
    %304 = vmatpush2.msra.mxu0 0.0
    %305 = vmatprep.subr.mxu0 0.0
    %306 = vmatpush2.msra.mxu0 0.0
    %307 = vmatprep.mubr.f32.mxu0 0.0
    %308 = vmatmul.mubr.f32.gmra.mxu0 %v106
    %v309 = vpop.f32.mrf.mxu0
    %v310 = vpop.f32.mrf.mxu0
    %311 = vmatprep.mubr.f32.mxu0 0.0
    %312 = vmatmul.mubr.f32.gmra.mxu0 %v107
    %v313 = vpop.f32.mrf.mxu0
    %v314 = vpop.f32.mrf.mxu0
    %315 = vmatprep.mubr.f32.mxu0 0.0
    %316 = vmatmul.mubr.f32.gmra.mxu0 %v108
    %v317 = vpop.f32.mrf.mxu0
    %v318 = vadd.f32 0.0, %v317
    %v319 = vpop.f32.mrf.mxu0
    %320 = vmatprep.mubr.f32.mxu0 0.0
    %321 = vmatmul.mubr.f32.gmra.mxu0 %v109
    %v322 = vpop.f32.mrf.mxu0
    %v323 = vadd.f32 0.0, %v322
    %v324 = vpop.f32.mrf.mxu0
    %325 = vdwg.mxu0
    %v326 = vlaneseq
    %v327 = vshrl.u32 %v326, 7
    %v328 = vsub.s32 0, %v327
    %v329 = vrot.slane %v104, %v328
    %v330 = vadd.f32 %v225, %v329
    %v331 = vadd.f32 %v230, %v329
    %v332 = vlaneseq
    %v333 = vshrl.u32 %v332, 7
    %v334 = vsub.s32 1, %v333
    %v335 = vrot.slane %v104, %v334
    %v336 = vlaneseq
    %v337 = vshrl.u32 %v336, 7
    %v338 = vsub.s32 1, %v337
    %v339 = vrot.slane %v105, %v338
    %v340 = vadd.f32 %v236, %v335
    %v341 = vadd.f32 %v318, %v339
    %v342 = vadd.f32 %v241, %v335
    %v343 = vadd.f32 %v323, %v339
    %vm344 = vcmask 261120
    %v346 = vsel %vm344, %v330, 0
    %v349 = vsel %vm344, %v340, 0
    %351 = vmatprep.subr.mxu0 0.0
    %352 = vmatpush1.xpose.msra.mxu0 0.0
    %353 = vmatprep.subr.mxu0 0.0
    %354 = vmatpush1.xpose.msra.mxu0 0.0
    %355 = vmatprep.subr.mxu0 0.0
    %356 = vmatpush1.xpose.msra.mxu0 0.0
    %357 = vmatprep.subr.mxu0 0.0
    %358 = vmatpush1.xpose.msra.mxu0 0.0
    %359 = vmatprep.subr.mxu0 0.0
    %360 = vmatpush1.xpose.msra.mxu0 0.0
    %361 = vmatprep.subr.mxu0 0.0
    %362 = vmatpush1.xpose.msra.mxu0 0.0
    %363 = vmatprep.subr.mxu0 0.0
    %364 = vmatpush1.xpose.msra.mxu0 0.0
    %365 = vmatprep.subr.mxu0 0.0
    %366 = vmatpush1.xpose.msra.mxu0 0.0
    %367 = vmatprep.subr.mxu0 0.0
    %368 = vmatpush1.xpose.msra.mxu0 0.0
    %369 = vmatprep.subr.mxu0 0.0
    %370 = vmatpush1.xpose.msra.mxu0 0.0
    %371 = vmatprep.subr.mxu0 0.0
    %372 = vmatpush1.xpose.msra.mxu0 0.0
    %373 = vmatprep.subr.mxu0 0.0
    %374 = vmatpush1.xpose.msra.mxu0 0.0
    %375 = vmatprep.subr.mxu0 0.0
    %376 = vmatpush1.xpose.msra.mxu0 0.0
    %377 = vmatprep.subr.mxu0 0.0
    %378 = vmatpush1.xpose.msra.mxu0 0.0
    %379 = vmatprep.subr.mxu0 0.0
    %380 = vmatpush1.xpose.msra.mxu0 0.0
    %381 = vmatprep.subr.mxu0 0.0
    %382 = vmatpush1.xpose.msra.mxu0 %v349
    %383 = vmatprep.subr.mxu0 0.0
    %384 = vmatpush2.xpose.msra.mxu0 0.0
    %385 = vmatprep.subr.mxu0 0.0
    %386 = vmatpush2.xpose.msra.mxu0 0.0
    %387 = vmatprep.subr.mxu0 0.0
    %388 = vmatpush2.xpose.msra.mxu0 0.0
    %389 = vmatprep.subr.mxu0 0.0
    %390 = vmatpush2.xpose.msra.mxu0 0.0
    %391 = vmatprep.subr.mxu0 0.0
    %392 = vmatpush2.xpose.msra.mxu0 0.0
    %393 = vmatprep.subr.mxu0 0.0
    %394 = vmatpush2.xpose.msra.mxu0 0.0
    %395 = vmatprep.subr.mxu0 0.0
    %396 = vmatpush2.xpose.msra.mxu0 0.0
    %397 = vmatprep.subr.mxu0 0.0
    %398 = vmatpush2.xpose.msra.mxu0 0.0
    %399 = vmatprep.subr.mxu0 0.0
    %400 = vmatpush2.xpose.msra.mxu0 0.0
    %401 = vmatprep.subr.mxu0 0.0
    %402 = vmatpush2.xpose.msra.mxu0 0.0
    %403 = vmatprep.subr.mxu0 0.0
    %404 = vmatpush2.xpose.msra.mxu0 0.0
    %405 = vmatprep.subr.mxu0 0.0
    %406 = vmatpush2.xpose.msra.mxu0 0.0
    %407 = vmatprep.subr.mxu0 0.0
    %408 = vmatpush2.xpose.msra.mxu0 0.0
    %409 = vmatprep.subr.mxu0 0.0
    %410 = vmatpush2.xpose.msra.mxu0 0.0
    %411 = vmatprep.subr.mxu0 0.0
    %412 = vmatpush2.xpose.msra.mxu0 0.0
    %413 = vmatprep.subr.mxu0 0.0
    %414 = vmatpush2.xpose.msra.mxu0 0.0
    %415 = vmatprep.mubr.f32.mxu0 0.0
    %416 = vmatmul.mubr.f32.gmra.mxu0 %v346
    %v417 = vpop.f32.mrf.mxu0
    %v418 = vadd.f32 0.0, %v417
    %v419 = vpop.f32.mrf.mxu0
    %420 = vdwg.mxu0
    %v422 = vsel %vm344, %v331, 0
    %v425 = vsel %vm344, %v342, 0
    %427 = vmatprep.subr.mxu0 0.0
    %428 = vmatpush1.xpose.msra.mxu0 0.0
    %429 = vmatprep.subr.mxu0 0.0
    %430 = vmatpush1.xpose.msra.mxu0 0.0
    %431 = vmatprep.subr.mxu0 0.0
    %432 = vmatpush1.xpose.msra.mxu0 0.0
    %433 = vmatprep.subr.mxu0 0.0
    %434 = vmatpush1.xpose.msra.mxu0 0.0
    %435 = vmatprep.subr.mxu0 0.0
    %436 = vmatpush1.xpose.msra.mxu0 0.0
    %437 = vmatprep.subr.mxu0 0.0
    %438 = vmatpush1.xpose.msra.mxu0 0.0
    %439 = vmatprep.subr.mxu0 0.0
    %440 = vmatpush1.xpose.msra.mxu0 0.0
    %441 = vmatprep.subr.mxu0 0.0
    %442 = vmatpush1.xpose.msra.mxu0 0.0
    %443 = vmatprep.subr.mxu0 0.0
    %444 = vmatpush1.xpose.msra.mxu0 0.0
    %445 = vmatprep.subr.mxu0 0.0
    %446 = vmatpush1.xpose.msra.mxu0 0.0
    %447 = vmatprep.subr.mxu0 0.0
    %448 = vmatpush1.xpose.msra.mxu0 0.0
    %449 = vmatprep.subr.mxu0 0.0
    %450 = vmatpush1.xpose.msra.mxu0 0.0
    %451 = vmatprep.subr.mxu0 0.0
    %452 = vmatpush1.xpose.msra.mxu0 0.0
    %453 = vmatprep.subr.mxu0 0.0
    %454 = vmatpush1.xpose.msra.mxu0 0.0
    %455 = vmatprep.subr.mxu0 0.0
    %456 = vmatpush1.xpose.msra.mxu0 0.0
    %457 = vmatprep.subr.mxu0 0.0
    %458 = vmatpush1.xpose.msra.mxu0 %v425
    %459 = vmatprep.subr.mxu0 0.0
    %460 = vmatpush2.xpose.msra.mxu0 0.0
    %461 = vmatprep.subr.mxu0 0.0
    %462 = vmatpush2.xpose.msra.mxu0 0.0
    %463 = vmatprep.subr.mxu0 0.0
    %464 = vmatpush2.xpose.msra.mxu0 0.0
    %465 = vmatprep.subr.mxu0 0.0
    %466 = vmatpush2.xpose.msra.mxu0 0.0
    %467 = vmatprep.subr.mxu0 0.0
    %468 = vmatpush2.xpose.msra.mxu0 0.0
    %469 = vmatprep.subr.mxu0 0.0
    %470 = vmatpush2.xpose.msra.mxu0 0.0
    %471 = vmatprep.subr.mxu0 0.0
    %472 = vmatpush2.xpose.msra.mxu0 0.0
    %473 = vmatprep.subr.mxu0 0.0
    %474 = vmatpush2.xpose.msra.mxu0 0.0
    %475 = vmatprep.subr.mxu0 0.0
    %476 = vmatpush2.xpose.msra.mxu0 0.0
    %477 = vmatprep.subr.mxu0 0.0
    %478 = vmatpush2.xpose.msra.mxu0 0.0
    %479 = vmatprep.subr.mxu0 0.0
    %480 = vmatpush2.xpose.msra.mxu0 0.0
    %481 = vmatprep.subr.mxu0 0.0
    %482 = vmatpush2.xpose.msra.mxu0 0.0
    %483 = vmatprep.subr.mxu0 0.0
    %484 = vmatpush2.xpose.msra.mxu0 0.0
    %485 = vmatprep.subr.mxu0 0.0
    %486 = vmatpush2.xpose.msra.mxu0 0.0
    %487 = vmatprep.subr.mxu0 0.0
    %488 = vmatpush2.xpose.msra.mxu0 0.0
    %489 = vmatprep.subr.mxu0 0.0
    %490 = vmatpush2.xpose.msra.mxu0 0.0
    %491 = vmatprep.mubr.f32.mxu0 0.0
    %492 = vmatmul.mubr.f32.gmra.mxu0 %v422
    %v493 = vpop.f32.mrf.mxu0
    %v494 = vadd.f32 0.0, %v493
    %v495 = vpop.f32.mrf.mxu0
    %496 = vdwg.mxu0
    %v497 = vmul.f32 %v418, 0.17677669
    %v498 = vmul.f32 %v494, 0.17677669
    %vm499 = vcmask 64512
    %v500 = vsel %vm499, %v497, -inf
    %501 = vmax.xlane.f32.xlu0 %v500
    %v502 = vpop.xlane.xlu0 %501
    %v503 = vsel %vm499, %v498, -inf
    %504 = vmax.xlane.f32.xlu0 %v503
    %v505 = vpop.xlane.xlu0 %504
    %v506 = vsub.f32 %v497, %v502
    %v507 = vsub.f32 %v498, %v505
    %v508 = vmul.f32 %v506, 1.442695
    %v509 = vpow.pop %v508
    %v510 = vmul.f32 %v507, 1.442695
    %v511 = vpow.pop %v510
    %v512 = vsel %vm499, %v509, 0.0
    %513 = vadd.xlane.f32.xlu0 %v512
    %v514 = vpop.xlane.xlu0 %513
    %v515 = vsel %vm499, %v511, 0.0
    %516 = vadd.xlane.f32.xlu0 %v515
    %v517 = vpop.xlane.xlu0 %516
    %v518 = vrcp.pop %v514
    %v519 = vrcp.pop %v517
    %v520 = vmul.f32 %v509, %v518
    %v521 = vmul.f32 %v511, %v519
    %v523 = vsel %vm499, %v520, 0
    %525 = vmatprep.subr.mxu0 0.0
    %526 = vmatpush1.msra.mxu0 0.0
    %527 = vmatprep.subr.mxu0 0.0
    %528 = vmatpush1.msra.mxu0 0.0
    %529 = vmatprep.subr.mxu0 0.0
    %530 = vmatpush1.msra.mxu0 0.0
    %531 = vmatprep.subr.mxu0 0.0
    %532 = vmatpush1.msra.mxu0 0.0
    %533 = vmatprep.subr.mxu0 0.0
    %534 = vmatpush1.msra.mxu0 0.0
    %535 = vmatprep.subr.mxu0 0.0
    %536 = vmatpush1.msra.mxu0 0.0
    %537 = vmatprep.subr.mxu0 0.0
    %538 = vmatpush1.msra.mxu0 0.0
    %539 = vmatprep.subr.mxu0 0.0
    %540 = vmatpush1.msra.mxu0 0.0
    %541 = vmatprep.subr.mxu0 0.0
    %542 = vmatpush1.msra.mxu0 0.0
    %543 = vmatprep.subr.mxu0 0.0
    %544 = vmatpush1.msra.mxu0 0.0
    %545 = vmatprep.subr.mxu0 0.0
    %546 = vmatpush1.msra.mxu0 0.0
    %547 = vmatprep.subr.mxu0 0.0
    %548 = vmatpush1.msra.mxu0 0.0
    %549 = vmatprep.subr.mxu0 0.0
    %550 = vmatpush1.msra.mxu0 0.0
    %551 = vmatprep.subr.mxu0 0.0
    %552 = vmatpush1.msra.mxu0 0.0
    %553 = vmatprep.subr.mxu0 0.0
    %554 = vmatpush1.msra.mxu0 0.0
    %555 = vmatprep.subr.mxu0 0.0
    %556 = vmatpush1.msra.mxu0 %v341
    %557 = vmatprep.subr.mxu0 0.0
    %558 = vmatpush2.msra.mxu0 0.0
    %559 = vmatprep.subr.mxu0 0.0
    %560 = vmatpush2.msra.mxu0 0.0
    %561 = vmatprep.subr.mxu0 0.0
    %562 = vmatpush2.msra.mxu0 0.0
    %563 = vmatprep.subr.mxu0 0.0
    %564 = vmatpush2.msra.mxu0 0.0
    %565 = vmatprep.subr.mxu0 0.0
    %566 = vmatpush2.msra.mxu0 0.0
    %567 = vmatprep.subr.mxu0 0.0
    %568 = vmatpush2.msra.mxu0 0.0
    %569 = vmatprep.subr.mxu0 0.0
    %570 = vmatpush2.msra.mxu0 0.0
    %571 = vmatprep.subr.mxu0 0.0
    %572 = vmatpush2.msra.mxu0 0.0
    %573 = vmatprep.subr.mxu0 0.0
    %574 = vmatpush2.msra.mxu0 0.0
    %575 = vmatprep.subr.mxu0 0.0
    %576 = vmatpush2.msra.mxu0 0.0
    %577 = vmatprep.subr.mxu0 0.0
    %578 = vmatpush2.msra.mxu0 0.0
    %579 = vmatprep.subr.mxu0 0.0
    %580 = vmatpush2.msra.mxu0 0.0
    %581 = vmatprep.subr.mxu0 0.0
    %582 = vmatpush2.msra.mxu0 0.0
    %583 = vmatprep.subr.mxu0 0.0
    %584 = vmatpush2.msra.mxu0 0.0
    %585 = vmatprep.subr.mxu0 0.0
    %586 = vmatpush2.msra.mxu0 0.0
    %587 = vmatprep.subr.mxu0 0.0
    %588 = vmatpush2.msra.mxu0 0.0
    %589 = vmatprep.mubr.f32.mxu0 0.0
    %590 = vmatmul.mubr.f32.gmra.mxu0 %v523
    %v591 = vpop.f32.mrf.mxu0
    %v592 = vadd.f32 0.0, %v591
    %v593 = vpop.f32.mrf.mxu0
    %594 = vdwg.mxu0
    %v596 = vsel %vm499, %v521, 0
    %598 = vmatprep.subr.mxu0 0.0
    %599 = vmatpush1.msra.mxu0 0.0
    %600 = vmatprep.subr.mxu0 0.0
    %601 = vmatpush1.msra.mxu0 0.0
    %602 = vmatprep.subr.mxu0 0.0
    %603 = vmatpush1.msra.mxu0 0.0
    %604 = vmatprep.subr.mxu0 0.0
    %605 = vmatpush1.msra.mxu0 0.0
    %606 = vmatprep.subr.mxu0 0.0
    %607 = vmatpush1.msra.mxu0 0.0
    %608 = vmatprep.subr.mxu0 0.0
    %609 = vmatpush1.msra.mxu0 0.0
    %610 = vmatprep.subr.mxu0 0.0
    %611 = vmatpush1.msra.mxu0 0.0
    %612 = vmatprep.subr.mxu0 0.0
    %613 = vmatpush1.msra.mxu0 0.0
    %614 = vmatprep.subr.mxu0 0.0
    %615 = vmatpush1.msra.mxu0 0.0
    %616 = vmatprep.subr.mxu0 0.0
    %617 = vmatpush1.msra.mxu0 0.0
    %618 = vmatprep.subr.mxu0 0.0
    %619 = vmatpush1.msra.mxu0 0.0
    %620 = vmatprep.subr.mxu0 0.0
    %621 = vmatpush1.msra.mxu0 0.0
    %622 = vmatprep.subr.mxu0 0.0
    %623 = vmatpush1.msra.mxu0 0.0
    %624 = vmatprep.subr.mxu0 0.0
    %625 = vmatpush1.msra.mxu0 0.0
    %626 = vmatprep.subr.mxu0 0.0
    %627 = vmatpush1.msra.mxu0 0.0
    %628 = vmatprep.subr.mxu0 0.0
    %629 = vmatpush1.msra.mxu0 %v343
    %630 = vmatprep.subr.mxu0 0.0
    %631 = vmatpush2.msra.mxu0 0.0
    %632 = vmatprep.subr.mxu0 0.0
    %633 = vmatpush2.msra.mxu0 0.0
    %634 = vmatprep.subr.mxu0 0.0
    %635 = vmatpush2.msra.mxu0 0.0
    %636 = vmatprep.subr.mxu0 0.0
    %637 = vmatpush2.msra.mxu0 0.0
    %638 = vmatprep.subr.mxu0 0.0
    %639 = vmatpush2.msra.mxu0 0.0
    %640 = vmatprep.subr.mxu0 0.0
    %641 = vmatpush2.msra.mxu0 0.0
    %642 = vmatprep.subr.mxu0 0.0
    %643 = vmatpush2.msra.mxu0 0.0
    %644 = vmatprep.subr.mxu0 0.0
    %645 = vmatpush2.msra.mxu0 0.0
    %646 = vmatprep.subr.mxu0 0.0
    %647 = vmatpush2.msra.mxu0 0.0
    %648 = vmatprep.subr.mxu0 0.0
    %649 = vmatpush2.msra.mxu0 0.0
    %650 = vmatprep.subr.mxu0 0.0
    %651 = vmatpush2.msra.mxu0 0.0
    %652 = vmatprep.subr.mxu0 0.0
    %653 = vmatpush2.msra.mxu0 0.0
    %654 = vmatprep.subr.mxu0 0.0
    %655 = vmatpush2.msra.mxu0 0.0
    %656 = vmatprep.subr.mxu0 0.0
    %657 = vmatpush2.msra.mxu0 0.0
    %658 = vmatprep.subr.mxu0 0.0
    %659 = vmatpush2.msra.mxu0 0.0
    %660 = vmatprep.subr.mxu0 0.0
    %661 = vmatpush2.msra.mxu0 0.0
    %662 = vmatprep.mubr.f32.mxu0 0.0
    %663 = vmatmul.mubr.f32.gmra.mxu0 %v596
    %v664 = vpop.f32.mrf.mxu0
    %v665 = vadd.f32 0.0, %v664
    %v666 = vpop.f32.mrf.mxu0
    %667 = vdwg.mxu0
    %v668 = vld [vmem:[#allocation8] sm:$0xff]
    %v669 = vld [vmem:[#allocation8 + $0x8] sm:$0xff]
    %v670 = vld [vmem:[#allocation8 + $0x10] sm:$0xff]
    %v671 = vld [vmem:[#allocation8 + $0x18] sm:$0xff]
    %v672 = vlaneseq
    %v673 = vshrl.u32 %v672, 7
    %v674 = vsub.s32 2, %v673
    %v675 = vrot.slane %v104, %v674
    %v677 = vsel %vm344, %v592, 0
    %v680 = vsel %vm344, %v665, 0
    %682 = vmatprep.subr.mxu0 0.0
    %683 = vmatpush1.msra.mxu0 0.0
    %684 = vmatprep.subr.mxu0 0.0
    %685 = vmatpush1.msra.mxu0 0.0
    %686 = vmatprep.subr.mxu0 0.0
    %687 = vmatpush1.msra.mxu0 0.0
    %688 = vmatprep.subr.mxu0 0.0
    %689 = vmatpush1.msra.mxu0 0.0
    %690 = vmatprep.subr.mxu0 0.0
    %691 = vmatpush1.msra.mxu0 0.0
    %692 = vmatprep.subr.mxu0 0.0
    %693 = vmatpush1.msra.mxu0 0.0
    %694 = vmatprep.subr.mxu0 0.0
    %695 = vmatpush1.msra.mxu0 0.0
    %696 = vmatprep.subr.mxu0 0.0
    %697 = vmatpush1.msra.mxu0 0.0
    %698 = vmatprep.subr.mxu0 0.0
    %699 = vmatpush1.msra.mxu0 0.0
    %700 = vmatprep.subr.mxu0 0.0
    %701 = vmatpush1.msra.mxu0 0.0
    %702 = vmatprep.subr.mxu0 0.0
    %703 = vmatpush1.msra.mxu0 0.0
    %704 = vmatprep.subr.mxu0 0.0
    %705 = vmatpush1.msra.mxu0 0.0
    %706 = vmatprep.subr.mxu0 0.0
    %707 = vmatpush1.msra.mxu0 %v671
    %708 = vmatprep.subr.mxu0 0.0
    %709 = vmatpush1.msra.mxu0 %v670
    %710 = vmatprep.subr.mxu0 0.0
    %711 = vmatpush1.msra.mxu0 %v669
    %712 = vmatprep.subr.mxu0 0.0
    %713 = vmatpush1.msra.mxu0 %v668
    %714 = vmatprep.subr.mxu0 0.0
    %715 = vmatpush2.msra.mxu0 0.0
    %716 = vmatprep.subr.mxu0 0.0
    %717 = vmatpush2.msra.mxu0 0.0
    %718 = vmatprep.subr.mxu0 0.0
    %719 = vmatpush2.msra.mxu0 0.0
    %720 = vmatprep.subr.mxu0 0.0
    %721 = vmatpush2.msra.mxu0 0.0
    %722 = vmatprep.subr.mxu0 0.0
    %723 = vmatpush2.msra.mxu0 0.0
    %724 = vmatprep.subr.mxu0 0.0
    %725 = vmatpush2.msra.mxu0 0.0
    %726 = vmatprep.subr.mxu0 0.0
    %727 = vmatpush2.msra.mxu0 0.0
    %728 = vmatprep.subr.mxu0 0.0
    %729 = vmatpush2.msra.mxu0 0.0
    %730 = vmatprep.subr.mxu0 0.0
    %731 = vmatpush2.msra.mxu0 0.0
    %732 = vmatprep.subr.mxu0 0.0
    %733 = vmatpush2.msra.mxu0 0.0
    %734 = vmatprep.subr.mxu0 0.0
    %735 = vmatpush2.msra.mxu0 0.0
    %736 = vmatprep.subr.mxu0 0.0
    %737 = vmatpush2.msra.mxu0 0.0
    %738 = vmatprep.subr.mxu0 0.0
    %739 = vmatpush2.msra.mxu0 0.0
    %740 = vmatprep.subr.mxu0 0.0
    %741 = vmatpush2.msra.mxu0 0.0
    %742 = vmatprep.subr.mxu0 0.0
    %743 = vmatpush2.msra.mxu0 0.0
    %744 = vmatprep.subr.mxu0 0.0
    %745 = vmatpush2.msra.mxu0 0.0
    %746 = vmatprep.mubr.f32.mxu0 0.0
    %747 = vmatmul.mubr.f32.gmra.mxu0 %v677
    %v748 = vpop.f32.mrf.mxu0
    %v749 = vadd.f32 %v675, %v748
    %v750 = vpop.f32.mrf.mxu0
    %751 = vmatprep.mubr.f32.mxu0 0.0
    %752 = vmatmul.mubr.f32.gmra.mxu0 %v680
    %v753 = vpop.f32.mrf.mxu0
    %v754 = vadd.f32 %v675, %v753
    %v755 = vpop.f32.mrf.mxu0
    %756 = vdwg.mxu0
    %757 = vrot.lane.b32.xlu0 %v330, 96
    %v758 = vpop.permute.xlu0 %757
    %759 = vrot.lane.b32.xlu0 %v340, 96
    %v760 = vpop.permute.xlu0 %759
    %v761 = vsel %vm344, %v758, 0
    %v763 = vsel %vm344, %v760, 0
    %765 = vmatprep.subr.mxu0 0.0
    %766 = vmatpush1.xpose.msra.mxu0 0.0
    %767 = vmatprep.subr.mxu0 0.0
    %768 = vmatpush1.xpose.msra.mxu0 0.0
    %769 = vmatprep.subr.mxu0 0.0
    %770 = vmatpush1.xpose.msra.mxu0 0.0
    %771 = vmatprep.subr.mxu0 0.0
    %772 = vmatpush1.xpose.msra.mxu0 0.0
    %773 = vmatprep.subr.mxu0 0.0
    %774 = vmatpush1.xpose.msra.mxu0 0.0
    %775 = vmatprep.subr.mxu0 0.0
    %776 = vmatpush1.xpose.msra.mxu0 0.0
    %777 = vmatprep.subr.mxu0 0.0
    %778 = vmatpush1.xpose.msra.mxu0 0.0
    %779 = vmatprep.subr.mxu0 0.0
    %780 = vmatpush1.xpose.msra.mxu0 0.0
    %781 = vmatprep.subr.mxu0 0.0
    %782 = vmatpush1.xpose.msra.mxu0 0.0
    %783 = vmatprep.subr.mxu0 0.0
    %784 = vmatpush1.xpose.msra.mxu0 0.0
    %785 = vmatprep.subr.mxu0 0.0
    %786 = vmatpush1.xpose.msra.mxu0 0.0
    %787 = vmatprep.subr.mxu0 0.0
    %788 = vmatpush1.xpose.msra.mxu0 0.0
    %789 = vmatprep.subr.mxu0 0.0
    %790 = vmatpush1.xpose.msra.mxu0 0.0
    %791 = vmatprep.subr.mxu0 0.0
    %792 = vmatpush1.xpose.msra.mxu0 0.0
    %793 = vmatprep.subr.mxu0 0.0
    %794 = vmatpush1.xpose.msra.mxu0 0.0
    %795 = vmatprep.subr.mxu0 0.0
    %796 = vmatpush1.xpose.msra.mxu0 %v763
    %797 = vmatprep.subr.mxu0 0.0
    %798 = vmatpush2.xpose.msra.mxu0 0.0
    %799 = vmatprep.subr.mxu0 0.0
    %800 = vmatpush2.xpose.msra.mxu0 0.0
    %801 = vmatprep.subr.mxu0 0.0
    %802 = vmatpush2.xpose.msra.mxu0 0.0
    %803 = vmatprep.subr.mxu0 0.0
    %804 = vmatpush2.xpose.msra.mxu0 0.0
    %805 = vmatprep.subr.mxu0 0.0
    %806 = vmatpush2.xpose.msra.mxu0 0.0
    %807 = vmatprep.subr.mxu0 0.0
    %808 = vmatpush2.xpose.msra.mxu0 0.0
    %809 = vmatprep.subr.mxu0 0.0
    %810 = vmatpush2.xpose.msra.mxu0 0.0
    %811 = vmatprep.subr.mxu0 0.0
    %812 = vmatpush2.xpose.msra.mxu0 0.0
    %813 = vmatprep.subr.mxu0 0.0
    %814 = vmatpush2.xpose.msra.mxu0 0.0
    %815 = vmatprep.subr.mxu0 0.0
    %816 = vmatpush2.xpose.msra.mxu0 0.0
    %817 = vmatprep.subr.mxu0 0.0
    %818 = vmatpush2.xpose.msra.mxu0 0.0
    %819 = vmatprep.subr.mxu0 0.0
    %820 = vmatpush2.xpose.msra.mxu0 0.0
    %821 = vmatprep.subr.mxu0 0.0
    %822 = vmatpush2.xpose.msra.mxu0 0.0
    %823 = vmatprep.subr.mxu0 0.0
    %824 = vmatpush2.xpose.msra.mxu0 0.0
    %825 = vmatprep.subr.mxu0 0.0
    %826 = vmatpush2.xpose.msra.mxu0 0.0
    %827 = vmatprep.subr.mxu0 0.0
    %828 = vmatpush2.xpose.msra.mxu0 0.0
    %829 = vmatprep.mubr.f32.mxu0 0.0
    %830 = vmatmul.mubr.f32.gmra.mxu0 %v761
    %v831 = vpop.f32.mrf.mxu0
    %v832 = vadd.f32 0.0, %v831
    %v833 = vpop.f32.mrf.mxu0
    %834 = vdwg.mxu0
    %835 = vrot.lane.b32.xlu0 %v331, 96
    %v836 = vpop.permute.xlu0 %835
    %837 = vrot.lane.b32.xlu0 %v342, 96
    %v838 = vpop.permute.xlu0 %837
    %v839 = vsel %vm344, %v836, 0
    %v841 = vsel %vm344, %v838, 0
    %843 = vmatprep.subr.mxu0 0.0
    %844 = vmatpush1.xpose.msra.mxu0 0.0
    %845 = vmatprep.subr.mxu0 0.0
    %846 = vmatpush1.xpose.msra.mxu0 0.0
    %847 = vmatprep.subr.mxu0 0.0
    %848 = vmatpush1.xpose.msra.mxu0 0.0
    %849 = vmatprep.subr.mxu0 0.0
    %850 = vmatpush1.xpose.msra.mxu0 0.0
    %851 = vmatprep.subr.mxu0 0.0
    %852 = vmatpush1.xpose.msra.mxu0 0.0
    %853 = vmatprep.subr.mxu0 0.0
    %854 = vmatpush1.xpose.msra.mxu0 0.0
    %855 = vmatprep.subr.mxu0 0.0
    %856 = vmatpush1.xpose.msra.mxu0 0.0
    %857 = vmatprep.subr.mxu0 0.0
    %858 = vmatpush1.xpose.msra.mxu0 0.0
    %859 = vmatprep.subr.mxu0 0.0
    %860 = vmatpush1.xpose.msra.mxu0 0.0
    %861 = vmatprep.subr.mxu0 0.0
    %862 = vmatpush1.xpose.msra.mxu0 0.0
    %863 = vmatprep.subr.mxu0 0.0
    %864 = vmatpush1.xpose.msra.mxu0 0.0
    %865 = vmatprep.subr.mxu0 0.0
    %866 = vmatpush1.xpose.msra.mxu0 0.0
    %867 = vmatprep.subr.mxu0 0.0
    %868 = vmatpush1.xpose.msra.mxu0 0.0
    %869 = vmatprep.subr.mxu0 0.0
    %870 = vmatpush1.xpose.msra.mxu0 0.0
    %871 = vmatprep.subr.mxu0 0.0
    %872 = vmatpush1.xpose.msra.mxu0 0.0
    %873 = vmatprep.subr.mxu0 0.0
    %874 = vmatpush1.xpose.msra.mxu0 %v841
    %875 = vmatprep.subr.mxu0 0.0
    %876 = vmatpush2.xpose.msra.mxu0 0.0
    %877 = vmatprep.subr.mxu0 0.0
    %878 = vmatpush2.xpose.msra.mxu0 0.0
    %879 = vmatprep.subr.mxu0 0.0
    %880 = vmatpush2.xpose.msra.mxu0 0.0
    %881 = vmatprep.subr.mxu0 0.0
    %882 = vmatpush2.xpose.msra.mxu0 0.0
    %883 = vmatprep.subr.mxu0 0.0
    %884 = vmatpush2.xpose.msra.mxu0 0.0
    %885 = vmatprep.subr.mxu0 0.0
    %886 = vmatpush2.xpose.msra.mxu0 0.0
    %887 = vmatprep.subr.mxu0 0.0
    %888 = vmatpush2.xpose.msra.mxu0 0.0
    %889 = vmatprep.subr.mxu0 0.0
    %890 = vmatpush2.xpose.msra.mxu0 0.0
    %891 = vmatprep.subr.mxu0 0.0
    %892 = vmatpush2.xpose.msra.mxu0 0.0
    %893 = vmatprep.subr.mxu0 0.0
    %894 = vmatpush2.xpose.msra.mxu0 0.0
    %895 = vmatprep.subr.mxu0 0.0
    %896 = vmatpush2.xpose.msra.mxu0 0.0
    %897 = vmatprep.subr.mxu0 0.0
    %898 = vmatpush2.xpose.msra.mxu0 0.0
    %899 = vmatprep.subr.mxu0 0.0
    %900 = vmatpush2.xpose.msra.mxu0 0.0
    %901 = vmatprep.subr.mxu0 0.0
    %902 = vmatpush2.xpose.msra.mxu0 0.0
    %903 = vmatprep.subr.mxu0 0.0
    %904 = vmatpush2.xpose.msra.mxu0 0.0
    %905 = vmatprep.subr.mxu0 0.0
    %906 = vmatpush2.xpose.msra.mxu0 0.0
    %907 = vmatprep.mubr.f32.mxu0 0.0
    %908 = vmatmul.mubr.f32.gmra.mxu0 %v839
    %v909 = vpop.f32.mrf.mxu0
    %v910 = vadd.f32 0.0, %v909
    %v911 = vpop.f32.mrf.mxu0
    %912 = vdwg.mxu0
    %v913 = vmul.f32 %v832, 0.17677669
    %v914 = vmul.f32 %v910, 0.17677669
    %v915 = vsel %vm499, %v913, -inf
    %916 = vmax.xlane.f32.xlu0 %v915
    %v917 = vpop.xlane.xlu0 %916
    %v918 = vsel %vm499, %v914, -inf
    %919 = vmax.xlane.f32.xlu0 %v918
    %v920 = vpop.xlane.xlu0 %919
    %v921 = vsub.f32 %v913, %v917
    %v922 = vsub.f32 %v914, %v920
    %v923 = vmul.f32 %v921, 1.442695
    %v924 = vpow.pop %v923
    %v925 = vmul.f32 %v922, 1.442695
    %v926 = vpow.pop %v925
    %v927 = vsel %vm499, %v924, 0.0
    %928 = vadd.xlane.f32.xlu0 %v927
    %v929 = vpop.xlane.xlu0 %928
    %v930 = vsel %vm499, %v926, 0.0
    %931 = vadd.xlane.f32.xlu0 %v930
    %v932 = vpop.xlane.xlu0 %931
    %v933 = vrcp.pop %v929
    %v934 = vrcp.pop %v932
    %v935 = vmul.f32 %v924, %v933
    %v936 = vmul.f32 %v926, %v934
    %938 = vrot.lane.b32.xlu0 %v341, 96
    %v939 = vpop.permute.xlu0 %938
    %v942 = vsel %vm499, %v935, 0
    %944 = vmatprep.subr.mxu0 0.0
    %945 = vmatpush1.msra.mxu0 0.0
    %946 = vmatprep.subr.mxu0 0.0
    %947 = vmatpush1.msra.mxu0 0.0
    %948 = vmatprep.subr.mxu0 0.0
    %949 = vmatpush1.msra.mxu0 0.0
    %950 = vmatprep.subr.mxu0 0.0
    %951 = vmatpush1.msra.mxu0 0.0
    %952 = vmatprep.subr.mxu0 0.0
    %953 = vmatpush1.msra.mxu0 0.0
    %954 = vmatprep.subr.mxu0 0.0
    %955 = vmatpush1.msra.mxu0 0.0
    %956 = vmatprep.subr.mxu0 0.0
    %957 = vmatpush1.msra.mxu0 0.0
    %958 = vmatprep.subr.mxu0 0.0
    %959 = vmatpush1.msra.mxu0 0.0
    %960 = vmatprep.subr.mxu0 0.0
    %961 = vmatpush1.msra.mxu0 0.0
    %962 = vmatprep.subr.mxu0 0.0
    %963 = vmatpush1.msra.mxu0 0.0
    %964 = vmatprep.subr.mxu0 0.0
    %965 = vmatpush1.msra.mxu0 0.0
    %966 = vmatprep.subr.mxu0 0.0
    %967 = vmatpush1.msra.mxu0 0.0
    %968 = vmatprep.subr.mxu0 0.0
    %969 = vmatpush1.msra.mxu0 0.0
    %970 = vmatprep.subr.mxu0 0.0
    %971 = vmatpush1.msra.mxu0 0.0
    %972 = vmatprep.subr.mxu0 0.0
    %973 = vmatpush1.msra.mxu0 0.0
    %974 = vmatprep.subr.mxu0 0.0
    %975 = vmatpush1.msra.mxu0 %v939
    %976 = vmatprep.subr.mxu0 0.0
    %977 = vmatpush2.msra.mxu0 0.0
    %978 = vmatprep.subr.mxu0 0.0
    %979 = vmatpush2.msra.mxu0 0.0
    %980 = vmatprep.subr.mxu0 0.0
    %981 = vmatpush2.msra.mxu0 0.0
    %982 = vmatprep.subr.mxu0 0.0
    %983 = vmatpush2.msra.mxu0 0.0
    %984 = vmatprep.subr.mxu0 0.0
    %985 = vmatpush2.msra.mxu0 0.0
    %986 = vmatprep.subr.mxu0 0.0
    %987 = vmatpush2.msra.mxu0 0.0
    %988 = vmatprep.subr.mxu0 0.0
    %989 = vmatpush2.msra.mxu0 0.0
    %990 = vmatprep.subr.mxu0 0.0
    %991 = vmatpush2.msra.mxu0 0.0
    %992 = vmatprep.subr.mxu0 0.0
    %993 = vmatpush2.msra.mxu0 0.0
    %994 = vmatprep.subr.mxu0 0.0
    %995 = vmatpush2.msra.mxu0 0.0
    %996 = vmatprep.subr.mxu0 0.0
    %997 = vmatpush2.msra.mxu0 0.0
    %998 = vmatprep.subr.mxu0 0.0
    %999 = vmatpush2.msra.mxu0 0.0
    %1000 = vmatprep.subr.mxu0 0.0
    %1001 = vmatpush2.msra.mxu0 0.0
    %1002 = vmatprep.subr.mxu0 0.0
    %1003 = vmatpush2.msra.mxu0 0.0
    %1004 = vmatprep.subr.mxu0 0.0
    %1005 = vmatpush2.msra.mxu0 0.0
    %1006 = vmatprep.subr.mxu0 0.0
    %1007 = vmatpush2.msra.mxu0 0.0
    %1008 = vmatprep.mubr.f32.mxu0 0.0
    %1009 = vmatmul.mubr.f32.gmra.mxu0 %v942
    %v1010 = vpop.f32.mrf.mxu0
    %v1011 = vadd.f32 0.0, %v1010
    %v1012 = vpop.f32.mrf.mxu0
    %1013 = vdwg.mxu0
    %1015 = vrot.lane.b32.xlu0 %v343, 96
    %v1016 = vpop.permute.xlu0 %1015
    %v1019 = vsel %vm499, %v936, 0
    %1021 = vmatprep.subr.mxu0 0.0
    %1022 = vmatpush1.msra.mxu0 0.0
    %1023 = vmatprep.subr.mxu0 0.0
    %1024 = vmatpush1.msra.mxu0 0.0
    %1025 = vmatprep.subr.mxu0 0.0
    %1026 = vmatpush1.msra.mxu0 0.0
    %1027 = vmatprep.subr.mxu0 0.0
    %1028 = vmatpush1.msra.mxu0 0.0
    %1029 = vmatprep.subr.mxu0 0.0
    %1030 = vmatpush1.msra.mxu0 0.0
    %1031 = vmatprep.subr.mxu0 0.0
    %1032 = vmatpush1.msra.mxu0 0.0
    %1033 = vmatprep.subr.mxu0 0.0
    %1034 = vmatpush1.msra.mxu0 0.0
    %1035 = vmatprep.subr.mxu0 0.0
    %1036 = vmatpush1.msra.mxu0 0.0
    %1037 = vmatprep.subr.mxu0 0.0
    %1038 = vmatpush1.msra.mxu0 0.0
    %1039 = vmatprep.subr.mxu0 0.0
    %1040 = vmatpush1.msra.mxu0 0.0
    %1041 = vmatprep.subr.mxu0 0.0
    %1042 = vmatpush1.msra.mxu0 0.0
    %1043 = vmatprep.subr.mxu0 0.0
    %1044 = vmatpush1.msra.mxu0 0.0
    %1045 = vmatprep.subr.mxu0 0.0
    %1046 = vmatpush1.msra.mxu0 0.0
    %1047 = vmatprep.subr.mxu0 0.0
    %1048 = vmatpush1.msra.mxu0 0.0
    %1049 = vmatprep.subr.mxu0 0.0
    %1050 = vmatpush1.msra.mxu0 0.0
    %1051 = vmatprep.subr.mxu0 0.0
    %1052 = vmatpush1.msra.mxu0 %v1016
    %1053 = vmatprep.subr.mxu0 0.0
    %1054 = vmatpush2.msra.mxu0 0.0
    %1055 = vmatprep.subr.mxu0 0.0
    %1056 = vmatpush2.msra.mxu0 0.0
    %1057 = vmatprep.subr.mxu0 0.0
    %1058 = vmatpush2.msra.mxu0 0.0
    %1059 = vmatprep.subr.mxu0 0.0
    %1060 = vmatpush2.msra.mxu0 0.0
    %1061 = vmatprep.subr.mxu0 0.0
    %1062 = vmatpush2.msra.mxu0 0.0
    %1063 = vmatprep.subr.mxu0 0.0
    %1064 = vmatpush2.msra.mxu0 0.0
    %1065 = vmatprep.subr.mxu0 0.0
    %1066 = vmatpush2.msra.mxu0 0.0
    %1067 = vmatprep.subr.mxu0 0.0
    %1068 = vmatpush2.msra.mxu0 0.0
    %1069 = vmatprep.subr.mxu0 0.0
    %1070 = vmatpush2.msra.mxu0 0.0
    %1071 = vmatprep.subr.mxu0 0.0
    %1072 = vmatpush2.msra.mxu0 0.0
    %1073 = vmatprep.subr.mxu0 0.0
    %1074 = vmatpush2.msra.mxu0 0.0
    %1075 = vmatprep.subr.mxu0 0.0
    %1076 = vmatpush2.msra.mxu0 0.0
    %1077 = vmatprep.subr.mxu0 0.0
    %1078 = vmatpush2.msra.mxu0 0.0
    %1079 = vmatprep.subr.mxu0 0.0
    %1080 = vmatpush2.msra.mxu0 0.0
    %1081 = vmatprep.subr.mxu0 0.0
    %1082 = vmatpush2.msra.mxu0 0.0
    %1083 = vmatprep.subr.mxu0 0.0
    %1084 = vmatpush2.msra.mxu0 0.0
    %1085 = vmatprep.mubr.f32.mxu0 0.0
    %1086 = vmatmul.mubr.f32.gmra.mxu0 %v1019
    %v1087 = vpop.f32.mrf.mxu0
    %v1088 = vadd.f32 0.0, %v1087
    %v1089 = vpop.f32.mrf.mxu0
    %1090 = vdwg.mxu0
    %v1091 = vld [vmem:[#allocation8 + $0x20] sm:$0xff]
    %v1092 = vld [vmem:[#allocation8 + $0x28] sm:$0xff]
    %v1093 = vld [vmem:[#allocation8 + $0x30] sm:$0xff]
    %v1094 = vld [vmem:[#allocation8 + $0x38] sm:$0xff]
    %v1096 = vsel %vm344, %v1011, 0
    %v1099 = vsel %vm344, %v1088, 0
    %1101 = vmatprep.subr.mxu0 0.0
    %1102 = vmatpush1.msra.mxu0 0.0
    %1103 = vmatprep.subr.mxu0 0.0
    %1104 = vmatpush1.msra.mxu0 0.0
    %1105 = vmatprep.subr.mxu0 0.0
    %1106 = vmatpush1.msra.mxu0 0.0
    %1107 = vmatprep.subr.mxu0 0.0
    %1108 = vmatpush1.msra.mxu0 0.0
    %1109 = vmatprep.subr.mxu0 0.0
    %1110 = vmatpush1.msra.mxu0 0.0
    %1111 = vmatprep.subr.mxu0 0.0
    %1112 = vmatpush1.msra.mxu0 0.0
    %1113 = vmatprep.subr.mxu0 0.0
    %1114 = vmatpush1.msra.mxu0 0.0
    %1115 = vmatprep.subr.mxu0 0.0
    %1116 = vmatpush1.msra.mxu0 0.0
    %1117 = vmatprep.subr.mxu0 0.0
    %1118 = vmatpush1.msra.mxu0 0.0
    %1119 = vmatprep.subr.mxu0 0.0
    %1120 = vmatpush1.msra.mxu0 0.0
    %1121 = vmatprep.subr.mxu0 0.0
    %1122 = vmatpush1.msra.mxu0 0.0
    %1123 = vmatprep.subr.mxu0 0.0
    %1124 = vmatpush1.msra.mxu0 0.0
    %1125 = vmatprep.subr.mxu0 0.0
    %1126 = vmatpush1.msra.mxu0 %v1094
    %1127 = vmatprep.subr.mxu0 0.0
    %1128 = vmatpush1.msra.mxu0 %v1093
    %1129 = vmatprep.subr.mxu0 0.0
    %1130 = vmatpush1.msra.mxu0 %v1092
    %1131 = vmatprep.subr.mxu0 0.0
    %1132 = vmatpush1.msra.mxu0 %v1091
    %1133 = vmatprep.subr.mxu0 0.0
    %1134 = vmatpush2.msra.mxu0 0.0
    %1135 = vmatprep.subr.mxu0 0.0
    %1136 = vmatpush2.msra.mxu0 0.0
    %1137 = vmatprep.subr.mxu0 0.0
    %1138 = vmatpush2.msra.mxu0 0.0
    %1139 = vmatprep.subr.mxu0 0.0
    %1140 = vmatpush2.msra.mxu0 0.0
    %1141 = vmatprep.subr.mxu0 0.0
    %1142 = vmatpush2.msra.mxu0 0.0
    %1143 = vmatprep.subr.mxu0 0.0
    %1144 = vmatpush2.msra.mxu0 0.0
    %1145 = vmatprep.subr.mxu0 0.0
    %1146 = vmatpush2.msra.mxu0 0.0
    %1147 = vmatprep.subr.mxu0 0.0
    %1148 = vmatpush2.msra.mxu0 0.0
    %1149 = vmatprep.subr.mxu0 0.0
    %1150 = vmatpush2.msra.mxu0 0.0
    %1151 = vmatprep.subr.mxu0 0.0
    %1152 = vmatpush2.msra.mxu0 0.0
    %1153 = vmatprep.subr.mxu0 0.0
    %1154 = vmatpush2.msra.mxu0 0.0
    %1155 = vmatprep.subr.mxu0 0.0
    %1156 = vmatpush2.msra.mxu0 0.0
    %1157 = vmatprep.subr.mxu0 0.0
    %1158 = vmatpush2.msra.mxu0 0.0
    %1159 = vmatprep.subr.mxu0 0.0
    %1160 = vmatpush2.msra.mxu0 0.0
    %1161 = vmatprep.subr.mxu0 0.0
    %1162 = vmatpush2.msra.mxu0 0.0
    %1163 = vmatprep.subr.mxu0 0.0
    %1164 = vmatpush2.msra.mxu0 0.0
    %1165 = vmatprep.mubr.f32.mxu0 0.0
    %1166 = vmatmul.mubr.f32.gmra.mxu0 %v1096
    %v1167 = vpop.f32.mrf.mxu0
    %v1168 = vadd.f32 0.0, %v1167
    %v1169 = vpop.f32.mrf.mxu0
    %1170 = vmatprep.mubr.f32.mxu0 0.0
    %1171 = vmatmul.mubr.f32.gmra.mxu0 %v1099
    %v1172 = vpop.f32.mrf.mxu0
    %v1173 = vadd.f32 0.0, %v1172
    %v1174 = vpop.f32.mrf.mxu0
    %1175 = vdwg.mxu0
    %v1176 = vadd.f32 %v749, %v1168
    %v1177 = vadd.f32 %v754, %v1173
    %1178 = vrot.lane.b32.xlu0 %v330, 64
    %v1179 = vpop.permute.xlu0 %1178
    %1180 = vrot.lane.b32.xlu0 %v340, 64
    %v1181 = vpop.permute.xlu0 %1180
    %v1182 = vsel %vm344, %v1179, 0
    %v1184 = vsel %vm344, %v1181, 0
    %1186 = vmatprep.subr.mxu0 0.0
    %1187 = vmatpush1.xpose.msra.mxu0 0.0
    %1188 = vmatprep.subr.mxu0 0.0
    %1189 = vmatpush1.xpose.msra.mxu0 0.0
    %1190 = vmatprep.subr.mxu0 0.0
    %1191 = vmatpush1.xpose.msra.mxu0 0.0
    %1192 = vmatprep.subr.mxu0 0.0
    %1193 = vmatpush1.xpose.msra.mxu0 0.0
    %1194 = vmatprep.subr.mxu0 0.0
    %1195 = vmatpush1.xpose.msra.mxu0 0.0
    %1196 = vmatprep.subr.mxu0 0.0
    %1197 = vmatpush1.xpose.msra.mxu0 0.0
    %1198 = vmatprep.subr.mxu0 0.0
    %1199 = vmatpush1.xpose.msra.mxu0 0.0
    %1200 = vmatprep.subr.mxu0 0.0
    %1201 = vmatpush1.xpose.msra.mxu0 0.0
    %1202 = vmatprep.subr.mxu0 0.0
    %1203 = vmatpush1.xpose.msra.mxu0 0.0
    %1204 = vmatprep.subr.mxu0 0.0
    %1205 = vmatpush1.xpose.msra.mxu0 0.0
    %1206 = vmatprep.subr.mxu0 0.0
    %1207 = vmatpush1.xpose.msra.mxu0 0.0
    %1208 = vmatprep.subr.mxu0 0.0
    %1209 = vmatpush1.xpose.msra.mxu0 0.0
    %1210 = vmatprep.subr.mxu0 0.0
    %1211 = vmatpush1.xpose.msra.mxu0 0.0
    %1212 = vmatprep.subr.mxu0 0.0
    %1213 = vmatpush1.xpose.msra.mxu0 0.0
    %1214 = vmatprep.subr.mxu0 0.0
    %1215 = vmatpush1.xpose.msra.mxu0 0.0
    %1216 = vmatprep.subr.mxu0 0.0
    %1217 = vmatpush1.xpose.msra.mxu0 %v1184
    %1218 = vmatprep.subr.mxu0 0.0
    %1219 = vmatpush2.xpose.msra.mxu0 0.0
    %1220 = vmatprep.subr.mxu0 0.0
    %1221 = vmatpush2.xpose.msra.mxu0 0.0
    %1222 = vmatprep.subr.mxu0 0.0
    %1223 = vmatpush2.xpose.msra.mxu0 0.0
    %1224 = vmatprep.subr.mxu0 0.0
    %1225 = vmatpush2.xpose.msra.mxu0 0.0
    %1226 = vmatprep.subr.mxu0 0.0
    %1227 = vmatpush2.xpose.msra.mxu0 0.0
    %1228 = vmatprep.subr.mxu0 0.0
    %1229 = vmatpush2.xpose.msra.mxu0 0.0
    %1230 = vmatprep.subr.mxu0 0.0
    %1231 = vmatpush2.xpose.msra.mxu0 0.0
    %1232 = vmatprep.subr.mxu0 0.0
    %1233 = vmatpush2.xpose.msra.mxu0 0.0
    %1234 = vmatprep.subr.mxu0 0.0
    %1235 = vmatpush2.xpose.msra.mxu0 0.0
    %1236 = vmatprep.subr.mxu0 0.0
    %1237 = vmatpush2.xpose.msra.mxu0 0.0
    %1238 = vmatprep.subr.mxu0 0.0
    %1239 = vmatpush2.xpose.msra.mxu0 0.0
    %1240 = vmatprep.subr.mxu0 0.0
    %1241 = vmatpush2.xpose.msra.mxu0 0.0
    %1242 = vmatprep.subr.mxu0 0.0
    %1243 = vmatpush2.xpose.msra.mxu0 0.0
    %1244 = vmatprep.subr.mxu0 0.0
    %1245 = vmatpush2.xpose.msra.mxu0 0.0
    %1246 = vmatprep.subr.mxu0 0.0
    %1247 = vmatpush2.xpose.msra.mxu0 0.0
    %1248 = vmatprep.subr.mxu0 0.0
    %1249 = vmatpush2.xpose.msra.mxu0 0.0
    %1250 = vmatprep.mubr.f32.mxu0 0.0
    %1251 = vmatmul.mubr.f32.gmra.mxu0 %v1182
    %v1252 = vpop.f32.mrf.mxu0
    %v1253 = vadd.f32 0.0, %v1252
    %v1254 = vpop.f32.mrf.mxu0
    %1255 = vdwg.mxu0
    %1256 = vrot.lane.b32.xlu0 %v331, 64
    %v1257 = vpop.permute.xlu0 %1256
    %1258 = vrot.lane.b32.xlu0 %v342, 64
    %v1259 = vpop.permute.xlu0 %1258
    %v1260 = vsel %vm344, %v1257, 0
    %v1262 = vsel %vm344, %v1259, 0
    %1264 = vmatprep.subr.mxu0 0.0
    %1265 = vmatpush1.xpose.msra.mxu0 0.0
    %1266 = vmatprep.subr.mxu0 0.0
    %1267 = vmatpush1.xpose.msra.mxu0 0.0
    %1268 = vmatprep.subr.mxu0 0.0
    %1269 = vmatpush1.xpose.msra.mxu0 0.0
    %1270 = vmatprep.subr.mxu0 0.0
    %1271 = vmatpush1.xpose.msra.mxu0 0.0
    %1272 = vmatprep.subr.mxu0 0.0
    %1273 = vmatpush1.xpose.msra.mxu0 0.0
    %1274 = vmatprep.subr.mxu0 0.0
    %1275 = vmatpush1.xpose.msra.mxu0 0.0
    %1276 = vmatprep.subr.mxu0 0.0
    %1277 = vmatpush1.xpose.msra.mxu0 0.0
    %1278 = vmatprep.subr.mxu0 0.0
    %1279 = vmatpush1.xpose.msra.mxu0 0.0
    %1280 = vmatprep.subr.mxu0 0.0
    %1281 = vmatpush1.xpose.msra.mxu0 0.0
    %1282 = vmatprep.subr.mxu0 0.0
    %1283 = vmatpush1.xpose.msra.mxu0 0.0
    %1284 = vmatprep.subr.mxu0 0.0
    %1285 = vmatpush1.xpose.msra.mxu0 0.0
    %1286 = vmatprep.subr.mxu0 0.0
    %1287 = vmatpush1.xpose.msra.mxu0 0.0
    %1288 = vmatprep.subr.mxu0 0.0
    %1289 = vmatpush1.xpose.msra.mxu0 0.0
    %1290 = vmatprep.subr.mxu0 0.0
    %1291 = vmatpush1.xpose.msra.mxu0 0.0
    %1292 = vmatprep.subr.mxu0 0.0
    %1293 = vmatpush1.xpose.msra.mxu0 0.0
    %1294 = vmatprep.subr.mxu0 0.0
    %1295 = vmatpush1.xpose.msra.mxu0 %v1262
    %1296 = vmatprep.subr.mxu0 0.0
    %1297 = vmatpush2.xpose.msra.mxu0 0.0
    %1298 = vmatprep.subr.mxu0 0.0
    %1299 = vmatpush2.xpose.msra.mxu0 0.0
    %1300 = vmatprep.subr.mxu0 0.0
    %1301 = vmatpush2.xpose.msra.mxu0 0.0
    %1302 = vmatprep.subr.mxu0 0.0
    %1303 = vmatpush2.xpose.msra.mxu0 0.0
    %1304 = vmatprep.subr.mxu0 0.0
    %1305 = vmatpush2.xpose.msra.mxu0 0.0
    %1306 = vmatprep.subr.mxu0 0.0
    %1307 = vmatpush2.xpose.msra.mxu0 0.0
    %1308 = vmatprep.subr.mxu0 0.0
    %1309 = vmatpush2.xpose.msra.mxu0 0.0
    %1310 = vmatprep.subr.mxu0 0.0
    %1311 = vmatpush2.xpose.msra.mxu0 0.0
    %1312 = vmatprep.subr.mxu0 0.0
    %1313 = vmatpush2.xpose.msra.mxu0 0.0
    %1314 = vmatprep.subr.mxu0 0.0
    %1315 = vmatpush2.xpose.msra.mxu0 0.0
    %1316 = vmatprep.subr.mxu0 0.0
    %1317 = vmatpush2.xpose.msra.mxu0 0.0
    %1318 = vmatprep.subr.mxu0 0.0
    %1319 = vmatpush2.xpose.msra.mxu0 0.0
    %1320 = vmatprep.subr.mxu0 0.0
    %1321 = vmatpush2.xpose.msra.mxu0 0.0
    %1322 = vmatprep.subr.mxu0 0.0
    %1323 = vmatpush2.xpose.msra.mxu0 0.0
    %1324 = vmatprep.subr.mxu0 0.0
    %1325 = vmatpush2.xpose.msra.mxu0 0.0
    %1326 = vmatprep.subr.mxu0 0.0
    %1327 = vmatpush2.xpose.msra.mxu0 0.0
    %1328 = vmatprep.mubr.f32.mxu0 0.0
    %1329 = vmatmul.mubr.f32.gmra.mxu0 %v1260
    %v1330 = vpop.f32.mrf.mxu0
    %v1331 = vadd.f32 0.0, %v1330
    %v1332 = vpop.f32.mrf.mxu0
    %1333 = vdwg.mxu0
    %v1334 = vmul.f32 %v1253, 0.17677669
    %v1335 = vmul.f32 %v1331, 0.17677669
    %v1336 = vsel %vm499, %v1334, -inf
    %1337 = vmax.xlane.f32.xlu0 %v1336
    %v1338 = vpop.xlane.xlu0 %1337
    %v1339 = vsel %vm499, %v1335, -inf
    %1340 = vmax.xlane.f32.xlu0 %v1339
    %v1341 = vpop.xlane.xlu0 %1340
    %v1342 = vsub.f32 %v1334, %v1338
    %v1343 = vsub.f32 %v1335, %v1341
    %v1344 = vmul.f32 %v1342, 1.442695
    %v1345 = vpow.pop %v1344
    %v1346 = vmul.f32 %v1343, 1.442695
    %v1347 = vpow.pop %v1346
    %v1348 = vsel %vm499, %v1345, 0.0
    %1349 = vadd.xlane.f32.xlu0 %v1348
    %v1350 = vpop.xlane.xlu0 %1349
    %v1351 = vsel %vm499, %v1347, 0.0
    %1352 = vadd.xlane.f32.xlu0 %v1351
    %v1353 = vpop.xlane.xlu0 %1352
    %v1354 = vrcp.pop %v1350
    %v1355 = vrcp.pop %v1353
    %v1356 = vmul.f32 %v1345, %v1354
    %v1357 = vmul.f32 %v1347, %v1355
    %1358 = vrot.lane.b32.xlu0 %v341, 64
    %v1359 = vpop.permute.xlu0 %1358
    %v1362 = vsel %vm499, %v1356, 0
    %1364 = vmatprep.subr.mxu0 0.0
    %1365 = vmatpush1.msra.mxu0 0.0
    %1366 = vmatprep.subr.mxu0 0.0
    %1367 = vmatpush1.msra.mxu0 0.0
    %1368 = vmatprep.subr.mxu0 0.0
    %1369 = vmatpush1.msra.mxu0 0.0
    %1370 = vmatprep.subr.mxu0 0.0
    %1371 = vmatpush1.msra.mxu0 0.0
    %1372 = vmatprep.subr.mxu0 0.0
    %1373 = vmatpush1.msra.mxu0 0.0
    %1374 = vmatprep.subr.mxu0 0.0
    %1375 = vmatpush1.msra.mxu0 0.0
    %1376 = vmatprep.subr.mxu0 0.0
    %1377 = vmatpush1.msra.mxu0 0.0
    %1378 = vmatprep.subr.mxu0 0.0
    %1379 = vmatpush1.msra.mxu0 0.0
    %1380 = vmatprep.subr.mxu0 0.0
    %1381 = vmatpush1.msra.mxu0 0.0
    %1382 = vmatprep.subr.mxu0 0.0
    %1383 = vmatpush1.msra.mxu0 0.0
    %1384 = vmatprep.subr.mxu0 0.0
    %1385 = vmatpush1.msra.mxu0 0.0
    %1386 = vmatprep.subr.mxu0 0.0
    %1387 = vmatpush1.msra.mxu0 0.0
    %1388 = vmatprep.subr.mxu0 0.0
    %1389 = vmatpush1.msra.mxu0 0.0
    %1390 = vmatprep.subr.mxu0 0.0
    %1391 = vmatpush1.msra.mxu0 0.0
    %1392 = vmatprep.subr.mxu0 0.0
    %1393 = vmatpush1.msra.mxu0 0.0
    %1394 = vmatprep.subr.mxu0 0.0
    %1395 = vmatpush1.msra.mxu0 %v1359
    %1396 = vmatprep.subr.mxu0 0.0
    %1397 = vmatpush2.msra.mxu0 0.0
    %1398 = vmatprep.subr.mxu0 0.0
    %1399 = vmatpush2.msra.mxu0 0.0
    %1400 = vmatprep.subr.mxu0 0.0
    %1401 = vmatpush2.msra.mxu0 0.0
    %1402 = vmatprep.subr.mxu0 0.0
    %1403 = vmatpush2.msra.mxu0 0.0
    %1404 = vmatprep.subr.mxu0 0.0
    %1405 = vmatpush2.msra.mxu0 0.0
    %1406 = vmatprep.subr.mxu0 0.0
    %1407 = vmatpush2.msra.mxu0 0.0
    %1408 = vmatprep.subr.mxu0 0.0
    %1409 = vmatpush2.msra.mxu0 0.0
    %1410 = vmatprep.subr.mxu0 0.0
    %1411 = vmatpush2.msra.mxu0 0.0
    %1412 = vmatprep.subr.mxu0 0.0
    %1413 = vmatpush2.msra.mxu0 0.0
    %1414 = vmatprep.subr.mxu0 0.0
    %1415 = vmatpush2.msra.mxu0 0.0
    %1416 = vmatprep.subr.mxu0 0.0
    %1417 = vmatpush2.msra.mxu0 0.0
    %1418 = vmatprep.subr.mxu0 0.0
    %1419 = vmatpush2.msra.mxu0 0.0
    %1420 = vmatprep.subr.mxu0 0.0
    %1421 = vmatpush2.msra.mxu0 0.0
    %1422 = vmatprep.subr.mxu0 0.0
    %1423 = vmatpush2.msra.mxu0 0.0
    %1424 = vmatprep.subr.mxu0 0.0
    %1425 = vmatpush2.msra.mxu0 0.0
    %1426 = vmatprep.subr.mxu0 0.0
    %1427 = vmatpush2.msra.mxu0 0.0
    %1428 = vmatprep.mubr.f32.mxu0 0.0
    %1429 = vmatmul.mubr.f32.gmra.mxu0 %v1362
    %v1430 = vpop.f32.mrf.mxu0
    %v1431 = vadd.f32 0.0, %v1430
    %v1432 = vpop.f32.mrf.mxu0
    %1433 = vdwg.mxu0
    %1434 = vrot.lane.b32.xlu0 %v343, 64
    %v1435 = vpop.permute.xlu0 %1434
    %v1438 = vsel %vm499, %v1357, 0
    %1440 = vmatprep.subr.mxu0 0.0
    %1441 = vmatpush1.msra.mxu0 0.0
    %1442 = vmatprep.subr.mxu0 0.0
    %1443 = vmatpush1.msra.mxu0 0.0
    %1444 = vmatprep.subr.mxu0 0.0
    %1445 = vmatpush1.msra.mxu0 0.0
    %1446 = vmatprep.subr.mxu0 0.0
    %1447 = vmatpush1.msra.mxu0 0.0
    %1448 = vmatprep.subr.mxu0 0.0
    %1449 = vmatpush1.msra.mxu0 0.0
    %1450 = vmatprep.subr.mxu0 0.0
    %1451 = vmatpush1.msra.mxu0 0.0
    %1452 = vmatprep.subr.mxu0 0.0
    %1453 = vmatpush1.msra.mxu0 0.0
    %1454 = vmatprep.subr.mxu0 0.0
    %1455 = vmatpush1.msra.mxu0 0.0
    %1456 = vmatprep.subr.mxu0 0.0
    %1457 = vmatpush1.msra.mxu0 0.0
    %1458 = vmatprep.subr.mxu0 0.0
    %1459 = vmatpush1.msra.mxu0 0.0
    %1460 = vmatprep.subr.mxu0 0.0
    %1461 = vmatpush1.msra.mxu0 0.0
    %1462 = vmatprep.subr.mxu0 0.0
    %1463 = vmatpush1.msra.mxu0 0.0
    %1464 = vmatprep.subr.mxu0 0.0
    %1465 = vmatpush1.msra.mxu0 0.0
    %1466 = vmatprep.subr.mxu0 0.0
    %1467 = vmatpush1.msra.mxu0 0.0
    %1468 = vmatprep.subr.mxu0 0.0
    %1469 = vmatpush1.msra.mxu0 0.0
    %1470 = vmatprep.subr.mxu0 0.0
    %1471 = vmatpush1.msra.mxu0 %v1435
    %1472 = vmatprep.subr.mxu0 0.0
    %1473 = vmatpush2.msra.mxu0 0.0
    %1474 = vmatprep.subr.mxu0 0.0
    %1475 = vmatpush2.msra.mxu0 0.0
    %1476 = vmatprep.subr.mxu0 0.0
    %1477 = vmatpush2.msra.mxu0 0.0
    %1478 = vmatprep.subr.mxu0 0.0
    %1479 = vmatpush2.msra.mxu0 0.0
    %1480 = vmatprep.subr.mxu0 0.0
    %1481 = vmatpush2.msra.mxu0 0.0
    %1482 = vmatprep.subr.mxu0 0.0
    %1483 = vmatpush2.msra.mxu0 0.0
    %1484 = vmatprep.subr.mxu0 0.0
    %1485 = vmatpush2.msra.mxu0 0.0
    %1486 = vmatprep.subr.mxu0 0.0
    %1487 = vmatpush2.msra.mxu0 0.0
    %1488 = vmatprep.subr.mxu0 0.0
    %1489 = vmatpush2.msra.mxu0 0.0
    %1490 = vmatprep.subr.mxu0 0.0
    %1491 = vmatpush2.msra.mxu0 0.0
    %1492 = vmatprep.subr.mxu0 0.0
    %1493 = vmatpush2.msra.mxu0 0.0
    %1494 = vmatprep.subr.mxu0 0.0
    %1495 = vmatpush2.msra.mxu0 0.0
    %1496 = vmatprep.subr.mxu0 0.0
    %1497 = vmatpush2.msra.mxu0 0.0
    %1498 = vmatprep.subr.mxu0 0.0
    %1499 = vmatpush2.msra.mxu0 0.0
    %1500 = vmatprep.subr.mxu0 0.0
    %1501 = vmatpush2.msra.mxu0 0.0
    %1502 = vmatprep.subr.mxu0 0.0
    %1503 = vmatpush2.msra.mxu0 0.0
    %1504 = vmatprep.mubr.f32.mxu0 0.0
    %1505 = vmatmul.mubr.f32.gmra.mxu0 %v1438
    %v1506 = vpop.f32.mrf.mxu0
    %v1507 = vadd.f32 0.0, %v1506
    %v1508 = vpop.f32.mrf.mxu0
    %1509 = vdwg.mxu0
    %v1510 = vld [vmem:[#allocation8 + $0x40] sm:$0xff]
    %v1511 = vld [vmem:[#allocation8 + $0x48] sm:$0xff]
    %v1512 = vld [vmem:[#allocation8 + $0x50] sm:$0xff]
    %v1513 = vld [vmem:[#allocation8 + $0x58] sm:$0xff]
    %v1515 = vsel %vm344, %v1431, 0
    %v1518 = vsel %vm344, %v1507, 0
    %1520 = vmatprep.subr.mxu0 0.0
    %1521 = vmatpush1.msra.mxu0 0.0
    %1522 = vmatprep.subr.mxu0 0.0
    %1523 = vmatpush1.msra.mxu0 0.0
    %1524 = vmatprep.subr.mxu0 0.0
    %1525 = vmatpush1.msra.mxu0 0.0
    %1526 = vmatprep.subr.mxu0 0.0
    %1527 = vmatpush1.msra.mxu0 0.0
    %1528 = vmatprep.subr.mxu0 0.0
    %1529 = vmatpush1.msra.mxu0 0.0
    %1530 = vmatprep.subr.mxu0 0.0
    %1531 = vmatpush1.msra.mxu0 0.0
    %1532 = vmatprep.subr.mxu0 0.0
    %1533 = vmatpush1.msra.mxu0 0.0
    %1534 = vmatprep.subr.mxu0 0.0
    %1535 = vmatpush1.msra.mxu0 0.0
    %1536 = vmatprep.subr.mxu0 0.0
    %1537 = vmatpush1.msra.mxu0 0.0
    %1538 = vmatprep.subr.mxu0 0.0
    %1539 = vmatpush1.msra.mxu0 0.0
    %1540 = vmatprep.subr.mxu0 0.0
    %1541 = vmatpush1.msra.mxu0 0.0
    %1542 = vmatprep.subr.mxu0 0.0
    %1543 = vmatpush1.msra.mxu0 0.0
    %1544 = vmatprep.subr.mxu0 0.0
    %1545 = vmatpush1.msra.mxu0 %v1513
    %1546 = vmatprep.subr.mxu0 0.0
    %1547 = vmatpush1.msra.mxu0 %v1512
    %1548 = vmatprep.subr.mxu0 0.0
    %1549 = vmatpush1.msra.mxu0 %v1511
    %1550 = vmatprep.subr.mxu0 0.0
    %1551 = vmatpush1.msra.mxu0 %v1510
    %1552 = vmatprep.subr.mxu0 0.0
    %1553 = vmatpush2.msra.mxu0 0.0
    %1554 = vmatprep.subr.mxu0 0.0
    %1555 = vmatpush2.msra.mxu0 0.0
    %1556 = vmatprep.subr.mxu0 0.0
    %1557 = vmatpush2.msra.mxu0 0.0
    %1558 = vmatprep.subr.mxu0 0.0
    %1559 = vmatpush2.msra.mxu0 0.0
    %1560 = vmatprep.subr.mxu0 0.0
    %1561 = vmatpush2.msra.mxu0 0.0
    %1562 = vmatprep.subr.mxu0 0.0
    %1563 = vmatpush2.msra.mxu0 0.0
    %1564 = vmatprep.subr.mxu0 0.0
    %1565 = vmatpush2.msra.mxu0 0.0
    %1566 = vmatprep.subr.mxu0 0.0
    %1567 = vmatpush2.msra.mxu0 0.0
    %1568 = vmatprep.subr.mxu0 0.0
    %1569 = vmatpush2.msra.mxu0 0.0
    %1570 = vmatprep.subr.mxu0 0.0
    %1571 = vmatpush2.msra.mxu0 0.0
    %1572 = vmatprep.subr.mxu0 0.0
    %1573 = vmatpush2.msra.mxu0 0.0
    %1574 = vmatprep.subr.mxu0 0.0
    %1575 = vmatpush2.msra.mxu0 0.0
    %1576 = vmatprep.subr.mxu0 0.0
    %1577 = vmatpush2.msra.mxu0 0.0
    %1578 = vmatprep.subr.mxu0 0.0
    %1579 = vmatpush2.msra.mxu0 0.0
    %1580 = vmatprep.subr.mxu0 0.0
    %1581 = vmatpush2.msra.mxu0 0.0
    %1582 = vmatprep.subr.mxu0 0.0
    %1583 = vmatpush2.msra.mxu0 0.0
    %1584 = vmatprep.mubr.f32.mxu0 0.0
    %1585 = vmatmul.mubr.f32.gmra.mxu0 %v1515
    %v1586 = vpop.f32.mrf.mxu0
    %v1587 = vadd.f32 0.0, %v1586
    %v1588 = vpop.f32.mrf.mxu0
    %1589 = vmatprep.mubr.f32.mxu0 0.0
    %1590 = vmatmul.mubr.f32.gmra.mxu0 %v1518
    %v1591 = vpop.f32.mrf.mxu0
    %v1592 = vadd.f32 0.0, %v1591
    %v1593 = vpop.f32.mrf.mxu0
    %1594 = vdwg.mxu0
    %v1595 = vadd.f32 %v1176, %v1587
    %v1596 = vadd.f32 %v1177, %v1592
    %1597 = vrot.lane.b32.xlu0 %v330, 32
    %v1598 = vpop.permute.xlu0 %1597
    %1599 = vrot.lane.b32.xlu0 %v340, 32
    %v1600 = vpop.permute.xlu0 %1599
    %v1601 = vsel %vm344, %v1598, 0
    %v1603 = vsel %vm344, %v1600, 0
    %1605 = vmatprep.subr.mxu0 0.0
    %1606 = vmatpush1.xpose.msra.mxu0 0.0
    %1607 = vmatprep.subr.mxu0 0.0
    %1608 = vmatpush1.xpose.msra.mxu0 0.0
    %1609 = vmatprep.subr.mxu0 0.0
    %1610 = vmatpush1.xpose.msra.mxu0 0.0
    %1611 = vmatprep.subr.mxu0 0.0
    %1612 = vmatpush1.xpose.msra.mxu0 0.0
    %1613 = vmatprep.subr.mxu0 0.0
    %1614 = vmatpush1.xpose.msra.mxu0 0.0
    %1615 = vmatprep.subr.mxu0 0.0
    %1616 = vmatpush1.xpose.msra.mxu0 0.0
    %1617 = vmatprep.subr.mxu0 0.0
    %1618 = vmatpush1.xpose.msra.mxu0 0.0
    %1619 = vmatprep.subr.mxu0 0.0
    %1620 = vmatpush1.xpose.msra.mxu0 0.0
    %1621 = vmatprep.subr.mxu0 0.0
    %1622 = vmatpush1.xpose.msra.mxu0 0.0
    %1623 = vmatprep.subr.mxu0 0.0
    %1624 = vmatpush1.xpose.msra.mxu0 0.0
    %1625 = vmatprep.subr.mxu0 0.0
    %1626 = vmatpush1.xpose.msra.mxu0 0.0
    %1627 = vmatprep.subr.mxu0 0.0
    %1628 = vmatpush1.xpose.msra.mxu0 0.0
    %1629 = vmatprep.subr.mxu0 0.0
    %1630 = vmatpush1.xpose.msra.mxu0 0.0
    %1631 = vmatprep.subr.mxu0 0.0
    %1632 = vmatpush1.xpose.msra.mxu0 0.0
    %1633 = vmatprep.subr.mxu0 0.0
    %1634 = vmatpush1.xpose.msra.mxu0 0.0
    %1635 = vmatprep.subr.mxu0 0.0
    %1636 = vmatpush1.xpose.msra.mxu0 %v1603
    %1637 = vmatprep.subr.mxu0 0.0
    %1638 = vmatpush2.xpose.msra.mxu0 0.0
    %1639 = vmatprep.subr.mxu0 0.0
    %1640 = vmatpush2.xpose.msra.mxu0 0.0
    %1641 = vmatprep.subr.mxu0 0.0
    %1642 = vmatpush2.xpose.msra.mxu0 0.0
    %1643 = vmatprep.subr.mxu0 0.0
    %1644 = vmatpush2.xpose.msra.mxu0 0.0
    %1645 = vmatprep.subr.mxu0 0.0
    %1646 = vmatpush2.xpose.msra.mxu0 0.0
    %1647 = vmatprep.subr.mxu0 0.0
    %1648 = vmatpush2.xpose.msra.mxu0 0.0
    %1649 = vmatprep.subr.mxu0 0.0
    %1650 = vmatpush2.xpose.msra.mxu0 0.0
    %1651 = vmatprep.subr.mxu0 0.0
    %1652 = vmatpush2.xpose.msra.mxu0 0.0
    %1653 = vmatprep.subr.mxu0 0.0
    %1654 = vmatpush2.xpose.msra.mxu0 0.0
    %1655 = vmatprep.subr.mxu0 0.0
    %1656 = vmatpush2.xpose.msra.mxu0 0.0
    %1657 = vmatprep.subr.mxu0 0.0
    %1658 = vmatpush2.xpose.msra.mxu0 0.0
    %1659 = vmatprep.subr.mxu0 0.0
    %1660 = vmatpush2.xpose.msra.mxu0 0.0
    %1661 = vmatprep.subr.mxu0 0.0
    %1662 = vmatpush2.xpose.msra.mxu0 0.0
    %1663 = vmatprep.subr.mxu0 0.0
    %1664 = vmatpush2.xpose.msra.mxu0 0.0
    %1665 = vmatprep.subr.mxu0 0.0
    %1666 = vmatpush2.xpose.msra.mxu0 0.0
    %1667 = vmatprep.subr.mxu0 0.0
    %1668 = vmatpush2.xpose.msra.mxu0 0.0
    %1669 = vmatprep.mubr.f32.mxu0 0.0
    %1670 = vmatmul.mubr.f32.gmra.mxu0 %v1601
    %v1671 = vpop.f32.mrf.mxu0
    %v1672 = vadd.f32 0.0, %v1671
    %v1673 = vpop.f32.mrf.mxu0
    %1674 = vdwg.mxu0
    %1675 = vrot.lane.b32.xlu0 %v331, 32
    %v1676 = vpop.permute.xlu0 %1675
    %1677 = vrot.lane.b32.xlu0 %v342, 32
    %v1678 = vpop.permute.xlu0 %1677
    %v1679 = vsel %vm344, %v1676, 0
    %v1681 = vsel %vm344, %v1678, 0
    %1683 = vmatprep.subr.mxu0 0.0
    %1684 = vmatpush1.xpose.msra.mxu0 0.0
    %1685 = vmatprep.subr.mxu0 0.0
    %1686 = vmatpush1.xpose.msra.mxu0 0.0
    %1687 = vmatprep.subr.mxu0 0.0
    %1688 = vmatpush1.xpose.msra.mxu0 0.0
    %1689 = vmatprep.subr.mxu0 0.0
    %1690 = vmatpush1.xpose.msra.mxu0 0.0
    %1691 = vmatprep.subr.mxu0 0.0
    %1692 = vmatpush1.xpose.msra.mxu0 0.0
    %1693 = vmatprep.subr.mxu0 0.0
    %1694 = vmatpush1.xpose.msra.mxu0 0.0
    %1695 = vmatprep.subr.mxu0 0.0
    %1696 = vmatpush1.xpose.msra.mxu0 0.0
    %1697 = vmatprep.subr.mxu0 0.0
    %1698 = vmatpush1.xpose.msra.mxu0 0.0
    %1699 = vmatprep.subr.mxu0 0.0
    %1700 = vmatpush1.xpose.msra.mxu0 0.0
    %1701 = vmatprep.subr.mxu0 0.0
    %1702 = vmatpush1.xpose.msra.mxu0 0.0
    %1703 = vmatprep.subr.mxu0 0.0
    %1704 = vmatpush1.xpose.msra.mxu0 0.0
    %1705 = vmatprep.subr.mxu0 0.0
    %1706 = vmatpush1.xpose.msra.mxu0 0.0
    %1707 = vmatprep.subr.mxu0 0.0
    %1708 = vmatpush1.xpose.msra.mxu0 0.0
    %1709 = vmatprep.subr.mxu0 0.0
    %1710 = vmatpush1.xpose.msra.mxu0 0.0
    %1711 = vmatprep.subr.mxu0 0.0
    %1712 = vmatpush1.xpose.msra.mxu0 0.0
    %1713 = vmatprep.subr.mxu0 0.0
    %1714 = vmatpush1.xpose.msra.mxu0 %v1681
    %1715 = vmatprep.subr.mxu0 0.0
    %1716 = vmatpush2.xpose.msra.mxu0 0.0
    %1717 = vmatprep.subr.mxu0 0.0
    %1718 = vmatpush2.xpose.msra.mxu0 0.0
    %1719 = vmatprep.subr.mxu0 0.0
    %1720 = vmatpush2.xpose.msra.mxu0 0.0
    %1721 = vmatprep.subr.mxu0 0.0
    %1722 = vmatpush2.xpose.msra.mxu0 0.0
    %1723 = vmatprep.subr.mxu0 0.0
    %1724 = vmatpush2.xpose.msra.mxu0 0.0
    %1725 = vmatprep.subr.mxu0 0.0
    %1726 = vmatpush2.xpose.msra.mxu0 0.0
    %1727 = vmatprep.subr.mxu0 0.0
    %1728 = vmatpush2.xpose.msra.mxu0 0.0
    %1729 = vmatprep.subr.mxu0 0.0
    %1730 = vmatpush2.xpose.msra.mxu0 0.0
    %1731 = vmatprep.subr.mxu0 0.0
    %1732 = vmatpush2.xpose.msra.mxu0 0.0
    %1733 = vmatprep.subr.mxu0 0.0
    %1734 = vmatpush2.xpose.msra.mxu0 0.0
    %1735 = vmatprep.subr.mxu0 0.0
    %1736 = vmatpush2.xpose.msra.mxu0 0.0
    %1737 = vmatprep.subr.mxu0 0.0
    %1738 = vmatpush2.xpose.msra.mxu0 0.0
    %1739 = vmatprep.subr.mxu0 0.0
    %1740 = vmatpush2.xpose.msra.mxu0 0.0
    %1741 = vmatprep.subr.mxu0 0.0
    %1742 = vmatpush2.xpose.msra.mxu0 0.0
    %1743 = vmatprep.subr.mxu0 0.0
    %1744 = vmatpush2.xpose.msra.mxu0 0.0
    %1745 = vmatprep.subr.mxu0 0.0
    %1746 = vmatpush2.xpose.msra.mxu0 0.0
    %1747 = vmatprep.mubr.f32.mxu0 0.0
    %1748 = vmatmul.mubr.f32.gmra.mxu0 %v1679
    %v1749 = vpop.f32.mrf.mxu0
    %v1750 = vadd.f32 0.0, %v1749
    %v1751 = vpop.f32.mrf.mxu0
    %1752 = vdwg.mxu0
    %v1753 = vmul.f32 %v1672, 0.17677669
    %v1754 = vmul.f32 %v1750, 0.17677669
    %v1755 = vsel %vm499, %v1753, -inf
    %1756 = vmax.xlane.f32.xlu0 %v1755
    %v1757 = vpop.xlane.xlu0 %1756
    %v1758 = vsel %vm499, %v1754, -inf
    %1759 = vmax.xlane.f32.xlu0 %v1758
    %v1760 = vpop.xlane.xlu0 %1759
    %v1761 = vsub.f32 %v1753, %v1757
    %v1762 = vsub.f32 %v1754, %v1760
    %v1763 = vmul.f32 %v1761, 1.442695
    %v1764 = vpow.pop %v1763
    %v1765 = vmul.f32 %v1762, 1.442695
    %v1766 = vpow.pop %v1765
    %v1767 = vsel %vm499, %v1764, 0.0
    %1768 = vadd.xlane.f32.xlu0 %v1767
    %v1769 = vpop.xlane.xlu0 %1768
    %v1770 = vsel %vm499, %v1766, 0.0
    %1771 = vadd.xlane.f32.xlu0 %v1770
    %v1772 = vpop.xlane.xlu0 %1771
    %v1773 = vrcp.pop %v1769
    %v1774 = vrcp.pop %v1772
    %v1775 = vmul.f32 %v1764, %v1773
    %v1776 = vmul.f32 %v1766, %v1774
    %1777 = vrot.lane.b32.xlu0 %v341, 32
    %v1778 = vpop.permute.xlu0 %1777
    %v1781 = vsel %vm499, %v1775, 0
    %1783 = vmatprep.subr.mxu0 0.0
    %1784 = vmatpush1.msra.mxu0 0.0
    %1785 = vmatprep.subr.mxu0 0.0
    %1786 = vmatpush1.msra.mxu0 0.0
    %1787 = vmatprep.subr.mxu0 0.0
    %1788 = vmatpush1.msra.mxu0 0.0
    %1789 = vmatprep.subr.mxu0 0.0
    %1790 = vmatpush1.msra.mxu0 0.0
    %1791 = vmatprep.subr.mxu0 0.0
    %1792 = vmatpush1.msra.mxu0 0.0
    %1793 = vmatprep.subr.mxu0 0.0
    %1794 = vmatpush1.msra.mxu0 0.0
    %1795 = vmatprep.subr.mxu0 0.0
    %1796 = vmatpush1.msra.mxu0 0.0
    %1797 = vmatprep.subr.mxu0 0.0
    %1798 = vmatpush1.msra.mxu0 0.0
    %1799 = vmatprep.subr.mxu0 0.0
    %1800 = vmatpush1.msra.mxu0 0.0
    %1801 = vmatprep.subr.mxu0 0.0
    %1802 = vmatpush1.msra.mxu0 0.0
    %1803 = vmatprep.subr.mxu0 0.0
    %1804 = vmatpush1.msra.mxu0 0.0
    %1805 = vmatprep.subr.mxu0 0.0
    %1806 = vmatpush1.msra.mxu0 0.0
    %1807 = vmatprep.subr.mxu0 0.0
    %1808 = vmatpush1.msra.mxu0 0.0
    %1809 = vmatprep.subr.mxu0 0.0
    %1810 = vmatpush1.msra.mxu0 0.0
    %1811 = vmatprep.subr.mxu0 0.0
    %1812 = vmatpush1.msra.mxu0 0.0
    %1813 = vmatprep.subr.mxu0 0.0
    %1814 = vmatpush1.msra.mxu0 %v1778
    %1815 = vmatprep.subr.mxu0 0.0
    %1816 = vmatpush2.msra.mxu0 0.0
    %1817 = vmatprep.subr.mxu0 0.0
    %1818 = vmatpush2.msra.mxu0 0.0
    %1819 = vmatprep.subr.mxu0 0.0
    %1820 = vmatpush2.msra.mxu0 0.0
    %1821 = vmatprep.subr.mxu0 0.0
    %1822 = vmatpush2.msra.mxu0 0.0
    %1823 = vmatprep.subr.mxu0 0.0
    %1824 = vmatpush2.msra.mxu0 0.0
    %1825 = vmatprep.subr.mxu0 0.0
    %1826 = vmatpush2.msra.mxu0 0.0
    %1827 = vmatprep.subr.mxu0 0.0
    %1828 = vmatpush2.msra.mxu0 0.0
    %1829 = vmatprep.subr.mxu0 0.0
    %1830 = vmatpush2.msra.mxu0 0.0
    %1831 = vmatprep.subr.mxu0 0.0
    %1832 = vmatpush2.msra.mxu0 0.0
    %1833 = vmatprep.subr.mxu0 0.0
    %1834 = vmatpush2.msra.mxu0 0.0
    %1835 = vmatprep.subr.mxu0 0.0
    %1836 = vmatpush2.msra.mxu0 0.0
    %1837 = vmatprep.subr.mxu0 0.0
    %1838 = vmatpush2.msra.mxu0 0.0
    %1839 = vmatprep.subr.mxu0 0.0
    %1840 = vmatpush2.msra.mxu0 0.0
    %1841 = vmatprep.subr.mxu0 0.0
    %1842 = vmatpush2.msra.mxu0 0.0
    %1843 = vmatprep.subr.mxu0 0.0
    %1844 = vmatpush2.msra.mxu0 0.0
    %1845 = vmatprep.subr.mxu0 0.0
    %1846 = vmatpush2.msra.mxu0 0.0
    %1847 = vmatprep.mubr.f32.mxu0 0.0
    %1848 = vmatmul.mubr.f32.gmra.mxu0 %v1781
    %v1849 = vpop.f32.mrf.mxu0
    %v1850 = vadd.f32 0.0, %v1849
    %v1851 = vpop.f32.mrf.mxu0
    %1852 = vdwg.mxu0
    %1853 = vrot.lane.b32.xlu0 %v343, 32
    %v1854 = vpop.permute.xlu0 %1853
    %v1857 = vsel %vm499, %v1776, 0
    %1859 = vmatprep.subr.mxu0 0.0
    %1860 = vmatpush1.msra.mxu0 0.0
    %1861 = vmatprep.subr.mxu0 0.0
    %1862 = vmatpush1.msra.mxu0 0.0
    %1863 = vmatprep.subr.mxu0 0.0
    %1864 = vmatpush1.msra.mxu0 0.0
    %1865 = vmatprep.subr.mxu0 0.0
    %1866 = vmatpush1.msra.mxu0 0.0
    %1867 = vmatprep.subr.mxu0 0.0
    %1868 = vmatpush1.msra.mxu0 0.0
    %1869 = vmatprep.subr.mxu0 0.0
    %1870 = vmatpush1.msra.mxu0 0.0
    %1871 = vmatprep.subr.mxu0 0.0
    %1872 = vmatpush1.msra.mxu0 0.0
    %1873 = vmatprep.subr.mxu0 0.0
    %1874 = vmatpush1.msra.mxu0 0.0
    %1875 = vmatprep.subr.mxu0 0.0
    %1876 = vmatpush1.msra.mxu0 0.0
    %1877 = vmatprep.subr.mxu0 0.0
    %1878 = vmatpush1.msra.mxu0 0.0
    %1879 = vmatprep.subr.mxu0 0.0
    %1880 = vmatpush1.msra.mxu0 0.0
    %1881 = vmatprep.subr.mxu0 0.0
    %1882 = vmatpush1.msra.mxu0 0.0
    %1883 = vmatprep.subr.mxu0 0.0
    %1884 = vmatpush1.msra.mxu0 0.0
    %1885 = vmatprep.subr.mxu0 0.0
    %1886 = vmatpush1.msra.mxu0 0.0
    %1887 = vmatprep.subr.mxu0 0.0
    %1888 = vmatpush1.msra.mxu0 0.0
    %1889 = vmatprep.subr.mxu0 0.0
    %1890 = vmatpush1.msra.mxu0 %v1854
    %1891 = vmatprep.subr.mxu0 0.0
    %1892 = vmatpush2.msra.mxu0 0.0
    %1893 = vmatprep.subr.mxu0 0.0
    %1894 = vmatpush2.msra.mxu0 0.0
    %1895 = vmatprep.subr.mxu0 0.0
    %1896 = vmatpush2.msra.mxu0 0.0
    %1897 = vmatprep.subr.mxu0 0.0
    %1898 = vmatpush2.msra.mxu0 0.0
    %1899 = vmatprep.subr.mxu0 0.0
    %1900 = vmatpush2.msra.mxu0 0.0
    %1901 = vmatprep.subr.mxu0 0.0
    %1902 = vmatpush2.msra.mxu0 0.0
    %1903 = vmatprep.subr.mxu0 0.0
    %1904 = vmatpush2.msra.mxu0 0.0
    %1905 = vmatprep.subr.mxu0 0.0
    %1906 = vmatpush2.msra.mxu0 0.0
    %1907 = vmatprep.subr.mxu0 0.0
    %1908 = vmatpush2.msra.mxu0 0.0
    %1909 = vmatprep.subr.mxu0 0.0
    %1910 = vmatpush2.msra.mxu0 0.0
    %1911 = vmatprep.subr.mxu0 0.0
    %1912 = vmatpush2.msra.mxu0 0.0
    %1913 = vmatprep.subr.mxu0 0.0
    %1914 = vmatpush2.msra.mxu0 0.0
    %1915 = vmatprep.subr.mxu0 0.0
    %1916 = vmatpush2.msra.mxu0 0.0
    %1917 = vmatprep.subr.mxu0 0.0
    %1918 = vmatpush2.msra.mxu0 0.0
    %1919 = vmatprep.subr.mxu0 0.0
    %1920 = vmatpush2.msra.mxu0 0.0
    %1921 = vmatprep.subr.mxu0 0.0
    %1922 = vmatpush2.msra.mxu0 0.0
    %1923 = vmatprep.mubr.f32.mxu0 0.0
    %1924 = vmatmul.mubr.f32.gmra.mxu0 %v1857
    %v1925 = vpop.f32.mrf.mxu0
    %v1926 = vadd.f32 0.0, %v1925
    %v1927 = vpop.f32.mrf.mxu0
    %1928 = vdwg.mxu0
    %v1929 = vld [vmem:[#allocation8 + $0x60] sm:$0xff]
    %v1930 = vld [vmem:[#allocation8 + $0x68] sm:$0xff]
    %v1931 = vld [vmem:[#allocation8 + $0x70] sm:$0xff]
    %v1932 = vld [vmem:[#allocation8 + $0x78] sm:$0xff]
    %v1934 = vsel %vm344, %v1850, 0
    %v1937 = vsel %vm344, %v1926, 0
    %1939 = vmatprep.subr.mxu0 0.0
    %1940 = vmatpush1.msra.mxu0 0.0
    %1941 = vmatprep.subr.mxu0 0.0
    %1942 = vmatpush1.msra.mxu0 0.0
    %1943 = vmatprep.subr.mxu0 0.0
    %1944 = vmatpush1.msra.mxu0 0.0
    %1945 = vmatprep.subr.mxu0 0.0
    %1946 = vmatpush1.msra.mxu0 0.0
    %1947 = vmatprep.subr.mxu0 0.0
    %1948 = vmatpush1.msra.mxu0 0.0
    %1949 = vmatprep.subr.mxu0 0.0
    %1950 = vmatpush1.msra.mxu0 0.0
    %1951 = vmatprep.subr.mxu0 0.0
    %1952 = vmatpush1.msra.mxu0 0.0
    %1953 = vmatprep.subr.mxu0 0.0
    %1954 = vmatpush1.msra.mxu0 0.0
    %1955 = vmatprep.subr.mxu0 0.0
    %1956 = vmatpush1.msra.mxu0 0.0
    %1957 = vmatprep.subr.mxu0 0.0
    %1958 = vmatpush1.msra.mxu0 0.0
    %1959 = vmatprep.subr.mxu0 0.0
    %1960 = vmatpush1.msra.mxu0 0.0
    %1961 = vmatprep.subr.mxu0 0.0
    %1962 = vmatpush1.msra.mxu0 0.0
    %1963 = vmatprep.subr.mxu0 0.0
    %1964 = vmatpush1.msra.mxu0 %v1932
    %1965 = vmatprep.subr.mxu0 0.0
    %1966 = vmatpush1.msra.mxu0 %v1931
    %1967 = vmatprep.subr.mxu0 0.0
    %1968 = vmatpush1.msra.mxu0 %v1930
    %1969 = vmatprep.subr.mxu0 0.0
    %1970 = vmatpush1.msra.mxu0 %v1929
    %1971 = vmatprep.subr.mxu0 0.0
    %1972 = vmatpush2.msra.mxu0 0.0
    %1973 = vmatprep.subr.mxu0 0.0
    %1974 = vmatpush2.msra.mxu0 0.0
    %1975 = vmatprep.subr.mxu0 0.0
    %1976 = vmatpush2.msra.mxu0 0.0
    %1977 = vmatprep.subr.mxu0 0.0
    %1978 = vmatpush2.msra.mxu0 0.0
    %1979 = vmatprep.subr.mxu0 0.0
    %1980 = vmatpush2.msra.mxu0 0.0
    %1981 = vmatprep.subr.mxu0 0.0
    %1982 = vmatpush2.msra.mxu0 0.0
    %1983 = vmatprep.subr.mxu0 0.0
    %1984 = vmatpush2.msra.mxu0 0.0
    %1985 = vmatprep.subr.mxu0 0.0
    %1986 = vmatpush2.msra.mxu0 0.0
    %1987 = vmatprep.subr.mxu0 0.0
    %1988 = vmatpush2.msra.mxu0 0.0
    %1989 = vmatprep.subr.mxu0 0.0
    %1990 = vmatpush2.msra.mxu0 0.0
    %1991 = vmatprep.subr.mxu0 0.0
    %1992 = vmatpush2.msra.mxu0 0.0
    %1993 = vmatprep.subr.mxu0 0.0
    %1994 = vmatpush2.msra.mxu0 0.0
    %1995 = vmatprep.subr.mxu0 0.0
    %1996 = vmatpush2.msra.mxu0 0.0
    %1997 = vmatprep.subr.mxu0 0.0
    %1998 = vmatpush2.msra.mxu0 0.0
    %1999 = vmatprep.subr.mxu0 0.0
    %2000 = vmatpush2.msra.mxu0 0.0
    %2001 = vmatprep.subr.mxu0 0.0
    %2002 = vmatpush2.msra.mxu0 0.0
    %2003 = vmatprep.mubr.f32.mxu0 0.0
    %2004 = vmatmul.mubr.f32.gmra.mxu0 %v1934
    %v2005 = vpop.f32.mrf.mxu0
    %v2006 = vadd.f32 0.0, %v2005
    %v2007 = vpop.f32.mrf.mxu0
    %2008 = vmatprep.mubr.f32.mxu0 0.0
    %2009 = vmatmul.mubr.f32.gmra.mxu0 %v1937
    %v2010 = vpop.f32.mrf.mxu0
    %v2011 = vadd.f32 0.0, %v2010
    %v2012 = vpop.f32.mrf.mxu0
    %2013 = vdwg.mxu0
    %v2014 = vadd.f32 %v1595, %v2006
    %v2015 = vadd.f32 %v1596, %v2011
    %v2016 = vld [vmem:[#allocation10] sm:$0xff]
    %v2017 = vld [vmem:[#allocation10 + $0x8] sm:$0xff]
    %v2018 = vld [vmem:[#allocation10 + $0x10] sm:$0xff]
    %v2019 = vld [vmem:[#allocation10 + $0x18] sm:$0xff]
    %v2020 = vld [vmem:[#allocation10 + $0x20] sm:$0xff]
    %v2021 = vld [vmem:[#allocation10 + $0x28] sm:$0xff]
    %v2022 = vld [vmem:[#allocation10 + $0x30] sm:$0xff]
    %v2023 = vld [vmem:[#allocation10 + $0x38] sm:$0xff]
    %v2024 = vld [vmem:[#allocation10 + $0x40] sm:$0xff]
    %v2025 = vld [vmem:[#allocation10 + $0x48] sm:$0xff]
    %v2026 = vld [vmem:[#allocation10 + $0x50] sm:$0xff]
    %v2027 = vld [vmem:[#allocation10 + $0x58] sm:$0xff]
    %v2028 = vld [vmem:[#allocation10 + $0x60] sm:$0xff]
    %v2029 = vld [vmem:[#allocation10 + $0x68] sm:$0xff]
    %v2030 = vld [vmem:[#allocation10 + $0x70] sm:$0xff]
    %v2031 = vld [vmem:[#allocation10 + $0x78] sm:$0xff]
    %v2032 = vlaneseq
    %v2033 = vshrl.u32 %v2032, 7
    %v2034 = vsub.s32 3, %v2033
    %v2035 = vrot.slane %v104, %v2034
    %2036 = vmatprep.subr.mxu0 0.0
    %2037 = vmatpush1.msra.mxu0 %v2031
    %2038 = vmatprep.subr.mxu0 0.0
    %2039 = vmatpush1.msra.mxu0 %v2030
    %2040 = vmatprep.subr.mxu0 0.0
    %2041 = vmatpush1.msra.mxu0 %v2029
    %2042 = vmatprep.subr.mxu0 0.0
    %2043 = vmatpush1.msra.mxu0 %v2028
    %2044 = vmatprep.subr.mxu0 0.0
    %2045 = vmatpush1.msra.mxu0 %v2027
    %2046 = vmatprep.subr.mxu0 0.0
    %2047 = vmatpush1.msra.mxu0 %v2026
    %2048 = vmatprep.subr.mxu0 0.0
    %2049 = vmatpush1.msra.mxu0 %v2025
    %2050 = vmatprep.subr.mxu0 0.0
    %2051 = vmatpush1.msra.mxu0 %v2024
    %2052 = vmatprep.subr.mxu0 0.0
    %2053 = vmatpush1.msra.mxu0 %v2023
    %2054 = vmatprep.subr.mxu0 0.0
    %2055 = vmatpush1.msra.mxu0 %v2022
    %2056 = vmatprep.subr.mxu0 0.0
    %2057 = vmatpush1.msra.mxu0 %v2021
    %2058 = vmatprep.subr.mxu0 0.0
    %2059 = vmatpush1.msra.mxu0 %v2020
    %2060 = vmatprep.subr.mxu0 0.0
    %2061 = vmatpush1.msra.mxu0 %v2019
    %2062 = vmatprep.subr.mxu0 0.0
    %2063 = vmatpush1.msra.mxu0 %v2018
    %2064 = vmatprep.subr.mxu0 0.0
    %2065 = vmatpush1.msra.mxu0 %v2017
    %2066 = vmatprep.subr.mxu0 0.0
    %2067 = vmatpush1.msra.mxu0 %v2016
    %2068 = vmatprep.subr.mxu0 0.0
    %2069 = vmatpush2.msra.mxu0 0.0
    %2070 = vmatprep.subr.mxu0 0.0
    %2071 = vmatpush2.msra.mxu0 0.0
    %2072 = vmatprep.subr.mxu0 0.0
    %2073 = vmatpush2.msra.mxu0 0.0
    %2074 = vmatprep.subr.mxu0 0.0
    %2075 = vmatpush2.msra.mxu0 0.0
    %2076 = vmatprep.subr.mxu0 0.0
    %2077 = vmatpush2.msra.mxu0 0.0
    %2078 = vmatprep.subr.mxu0 0.0
    %2079 = vmatpush2.msra.mxu0 0.0
    %2080 = vmatprep.subr.mxu0 0.0
    %2081 = vmatpush2.msra.mxu0 0.0
    %2082 = vmatprep.subr.mxu0 0.0
    %2083 = vmatpush2.msra.mxu0 0.0
    %2084 = vmatprep.subr.mxu0 0.0
    %2085 = vmatpush2.msra.mxu0 0.0
    %2086 = vmatprep.subr.mxu0 0.0
    %2087 = vmatpush2.msra.mxu0 0.0
    %2088 = vmatprep.subr.mxu0 0.0
    %2089 = vmatpush2.msra.mxu0 0.0
    %2090 = vmatprep.subr.mxu0 0.0
    %2091 = vmatpush2.msra.mxu0 0.0
    %2092 = vmatprep.subr.mxu0 0.0
    %2093 = vmatpush2.msra.mxu0 0.0
    %2094 = vmatprep.subr.mxu0 0.0
    %2095 = vmatpush2.msra.mxu0 0.0
    %2096 = vmatprep.subr.mxu0 0.0
    %2097 = vmatpush2.msra.mxu0 0.0
    %2098 = vmatprep.subr.mxu0 0.0
    %2099 = vmatpush2.msra.mxu0 0.0
    %2100 = vmatprep.mubr.f32.mxu0 0.0
    %2101 = vmatmul.mubr.f32.gmra.mxu0 %v2014
    %v2102 = vpop.f32.mrf.mxu0
    %v2103 = vadd.f32 %v2035, %v2102
    %v2104 = vpop.f32.mrf.mxu0
    %2105 = vmatprep.mubr.f32.mxu0 0.0
    %2106 = vmatmul.mubr.f32.gmra.mxu0 %v2015
    %v2107 = vpop.f32.mrf.mxu0
    %v2108 = vadd.f32 %v2035, %v2107
    %v2109 = vpop.f32.mrf.mxu0
    %2110 = vdwg.mxu0
    %v2111 = vmax.f32 %v2103, 0.0
    %v2112 = vmax.f32 %v2108, 0.0
    %v2113 = vadd.f32 %v106, %v2111
    %v2114 = vadd.f32 %v107, %v2112
    %2115 = vadd.xlane.f32.xlu0 %v2113
    %v2116 = vpop.xlane.xlu0 %2115
    %2117 = vadd.xlane.f32.xlu0 %v2114
    %v2118 = vpop.xlane.xlu0 %2117
    %v2119 = vrcp.pop 128.0
    %v2120 = vmul.f32 %v2116, %v2119
    %v2121 = vmul.f32 %v2118, %v2119
    %v2122 = vsub.f32 %v2113, %v2120
    %v2123 = vsub.f32 %v2114, %v2121
    %v2124 = vmul.f32 %v2122, %v2122
    %v2125 = vmul.f32 %v2123, %v2123
    %2126 = vadd.xlane.f32.xlu0 %v2124
    %v2127 = vpop.xlane.xlu0 %2126
    %2128 = vadd.xlane.f32.xlu0 %v2125
    %v2129 = vpop.xlane.xlu0 %2128
    %v2130 = vmul.f32 %v2127, %v2119
    %v2131 = vmul.f32 %v2129, %v2119
    %v2132 = vadd.f32 %v2130, 1e-05
    %v2133 = vadd.f32 %v2131, 1e-05
    %v2134 = vrsqrt.pop %v2132
    %v2135 = vrsqrt.pop %v2133
    %v2136 = vmul.f32 %v2122, %v2134
    %v2137 = vmul.f32 %v2123, %v2135
    %v2138 = vlaneseq
    %v2139 = vshrl.u32 %v2138, 7
    %v2140 = vsub.s32 4, %v2139
    %v2141 = vrot.slane %v104, %v2140
    %v2142 = vmul.f32 %v2136, %v2141
    %v2143 = vmul.f32 %v2137, %v2141
    %v2144 = vlaneseq
    %v2145 = vshrl.u32 %v2144, 7
    %v2146 = vsub.s32 5, %v2145
    %v2147 = vrot.slane %v104, %v2146
    %v2148 = vadd.f32 %v2142, %v2147
    %v2149 = vadd.f32 %v2143, %v2147
    %2150 = vst [vmem:[#allocation13] sm:$0xff] %v2148
    %2151 = vst [vmem:[#allocation13 + $0x8] sm:$0xff] %v2149
    // Predicated region
    $region50: #{tpu_custom_call.1} parent=1 // pred_check
      _
    $region51: #{tpu_custom_call.1} parent=1 // pred_check_branch
      %2153 = sbr.rel (0) target = $region53
    $region52: #{tpu_custom_call.1} parent=1 // pred_region
      %s2155 = ssub.s32 256, 256
      %2156 = vsyncadd [#allocation4], %s2155
      %s2157 = sshll.u32 [#allocation13], 4
      %s2158 = int_to_ptr.vmem [resolvable:$true] %s2157
      %2163 = dma.vmem_to_hbm [thread:$0]  %s2158, 256, %s6, [#allocation4], 128, 128, 8
    $region53: #{tpu_custom_call.1} parent=1 // pred_fallthru
      _
    // Predicated region
    $region54: #{tpu_custom_call.1} parent=1 // pred_check
      _
    $region55: #{tpu_custom_call.1} parent=1 // pred_check_branch
      %2165 = sbr.rel (0) target = $region57
    $region56: #{tpu_custom_call.1} parent=1 // pred_region
      %2166 = dma.done [#allocation4], 256
    $region57: #{tpu_custom_call.1} parent=1 // pred_fallthru
      _
    %2167 = vsyncpa [#allocation3], 1
    %2168 = vsyncpa [#allocation6], 1
    %2169 = vsyncpa [#allocation9], 1
    %2170 = vsyncpa [#allocation12], 1
    %2171 = vsyncpa [#allocation4], 1

</llo_original>
